<compile_context>
chip_gen: v5e
topology: v5e:2x2
jax: 0.10.0
libtpu: 0.0.40
codegen_flags: <defaults>
</compile_context>

<pallas_src>
import jax
import jax.numpy as jnp
from jax.experimental import pallas as pl
from jax.experimental.pallas import tpu as pltpu


# ----------------------------------------------------------------------------
# Parameter fusion helpers (wrapper-side JAX; negligible cost, fused by XLA)
# ----------------------------------------------------------------------------
def _fuse_gru_params(p):
    """Direction-fused, gate-grouped GRU weights: columns [r_f r_b | z_f z_b | n_f n_b]."""
    H = p["wh_f"].shape[0]

    def group(wf, wb):
        return jnp.concatenate(
            [wf[:, 0:H], wb[:, 0:H],
             wf[:, H:2 * H], wb[:, H:2 * H],
             wf[:, 2 * H:3 * H], wb[:, 2 * H:3 * H]], axis=1)

    wi_g = group(p["wi_f"], p["wi_b"]).astype(jnp.bfloat16)       # (E, 6H)
    bi_g = group(p["bi_f"], p["bi_b"])                            # (1, 6H)
    bh_g = group(p["bh_f"], p["bh_b"])                            # (1, 6H)
    zf = jnp.zeros_like(p["wh_f"])
    zb = jnp.zeros_like(p["wh_b"])
    # Block-diagonal recurrent weight: rows 0:H act on h_fwd, rows H:2H on h_bwd.
    # TODO(synk): at production H this pads the MXU with zeros; split into two
    #             (B,H)@(H,3H) matmuls (or one direction per core on v7x).
    wh_g = jnp.concatenate([group(p["wh_f"], zb), group(zf, p["wh_b"])], axis=0)
    return wi_g, bi_g, wh_g.astype(jnp.bfloat16), bh_g


# ----------------------------------------------------------------------------
# Fused kernel: bi-GRU recurrence + BAFN attention + folded pooling/BN/FC head
# ----------------------------------------------------------------------------
def _barlinedp_kernel(x_ref, keep_ref, wi_ref, bi_ref, wh_ref, bh_ref,
                      uw_ref, ub_ref, mw_ref, mb_ref, qsum_ref, qb_ref,
                      weff_ref, beff_ref, out_ref,
                      gi_scr, ctx_scr, lp_scr, ctxbm_scr, cp_scr):
    # x_ref    : (L*B, E)  bf16  time-major line embeddings (row = t*B + b)
    # keep_ref : (B, N, 1) f32   1.0 where line (b, t) is not all-zero (from f32 input)
    # out_ref  : (B, 128)  f32   packed [score | diag(head-summed att) | zero pad]
    L, B, H2 = ctx_scr.shape
    H = H2 // 2
    G = gi_scr.shape[2]                 # 6H
    N = L
    D3 = lp_scr.shape[2]

    x = x_ref[...]                                                  # (L*B, E) bf16

    # --- hoisted GEMMs: GRU input projection + BAFN l-projection (whole batch) ---
    gi_all = jnp.dot(x, wi_ref[...],
                     preferred_element_type=jnp.float32) + bi_ref[...]      # (L*B, 6H)
    lp_all = jnp.maximum(
        jnp.dot(x, uw_ref[...],
                preferred_element_type=jnp.float32) + ub_ref[...], 0.0)     # (L*B, 3D)

    # lane mask: True on the forward-direction half of each [f|b] gate group
    lane = jax.lax.broadcasted_iota(jnp.int32, (1, G), 1)
    fwd_cols = ((lane < H) |
                ((lane >= H2) & (lane < H2 + H)) |
                ((lane >= 2 * H2) & (lane < 2 * H2 + H)))

    # Prologue (off the serial chain): pre-select per-step gate inputs and
    # restage the l-projection batch-major.  Only contiguous row slices.
    for t in range(L):
        rows_t = gi_all[t * B:(t + 1) * B, :]                        # (B, 6H)
        rows_r = gi_all[(L - 1 - t) * B:(L - t) * B, :]              # (B, 6H)
        gi_scr[t] = jnp.where(fwd_cols, rows_t, rows_r)
        lp_scr[:, t, :] = lp_all[t * B:(t + 1) * B, :]

    # --- GRU recurrence: fused fwd/bwd directions, one matmul per step ---------
    wh = wh_ref[...]
    bh = jnp.broadcast_to(bh_ref[...], (B, G))                       # hoisted broadcast

    def step(i, h):              # h = [h_fwd | h_bwd]  (B, 2H) f32
        gi = gi_scr[i]                                               # single contiguous load
        gh = jnp.dot(h.astype(jnp.bfloat16), wh,
                     preferred_element_type=jnp.float32) + bh        # (B, 6H)
        r = jax.nn.sigmoid(gi[:, 0:H2] + gh[:, 0:H2])
        z = jax.nn.sigmoid(gi[:, H2:2 * H2] + gh[:, H2:2 * H2])
        n = jnp.tanh(gi[:, 2 * H2:3 * H2] + r * gh[:, 2 * H2:3 * H2])
        h_new = (1.0 - z) * n + z * h
        ctx_scr[i, :, 0:H] = h_new[:, 0:H]            # forward hidden at time i
        ctx_scr[L - 1 - i, :, H:H2] = h_new[:, H:H2]  # backward hidden at time L-1-i
        return h_new

    # TODO(synk): production L -> partial unroll + pltpu.matmul_push_rhs for wh.
    jax.lax.fori_loop(0, L, step, jnp.zeros((B, H2), jnp.float32), unroll=True)

    # --- BAFN: batch-major restage of contexts + ONE c-projection GEMM ---------
    for b in range(B):
        ctxbm_scr[b * N:(b + 1) * N, :] = ctx_scr[:, b, :]
    cp_all = jnp.maximum(
        jnp.dot(ctxbm_scr[...].astype(jnp.bfloat16), mw_ref[...],
                preferred_element_type=jnp.float32) + mb_ref[...], 0.0)     # (B*N, 3D)
    for b in range(B):
        cp_scr[b] = cp_all[b * N:(b + 1) * N, :]

    lp3 = lp_scr[...]                                                # (B, N, 3D)
    cp3 = cp_scr[...]                                                # (B, N, 3D)
    cp16 = cp3.astype(jnp.bfloat16)
    keep = keep_ref[...]                                             # (B, N, 1)
    qb = qb_ref[...]                                                 # (1, 1)

    # head-collapsed bilinear attention (softmax=False path is linear in heads)
    lq = lp3 * qsum_ref[...]                                         # (B, N, 3D)
    att = jnp.einsum('bvk,bqk->bvq', lq.astype(jnp.bfloat16), cp16,
                     preferred_element_type=jnp.float32)             # (B, N, N)
    att = (att + qb) * keep                                          # mask all-zero lines

    # attention pooling: f[b,k] = sum_{v,q} lp[b,v,k] att[b,v,q] cp[b,q,k]
    tmp = jnp.einsum('bvq,bqk->bvk', att.astype(jnp.bfloat16), cp16,
                     preferred_element_type=jnp.float32)             # (B, N, 3D)
    f = jnp.sum(lp3 * tmp, axis=1)                                   # (B, 3D)

    # AvgPool*k (group-sum) + eval-BatchNorm + fc head folded into one affine
    scores = jnp.sum(f * weff_ref[...], axis=1, keepdims=True) + beff_ref[...]   # (B, 1)

    # diagonal of the head-summed attention (already masked + biased).
    # TODO(synk): for large N compute the diag as a per-row lane reduce instead.
    eye = (jax.lax.broadcasted_iota(jnp.int32, (N, N), 0) ==
           jax.lax.broadcasted_iota(jnp.int32, (N, N), 1)).astype(jnp.float32)
    diag = jnp.sum(att * eye, axis=1)                                # (B, N)

    # single unmasked lane-dense slab store
    pad = jnp.zeros((B, out_ref.shape[1] - 1 - N), jnp.float32)
    out_ref[...] = jnp.concatenate([scores, diag, pad], axis=1)


def _full_spec(shape):
    nd = len(shape)
    return pl.BlockSpec(shape, lambda i, _nd=nd: (0,) * _nd)


@jax.jit
def barlinedp_forward(code, params):
    """code: (B, L, E) f32 padded equal-length files -> (scores (B,1), sent_att_weights (B,L))."""
    B, L, E = code.shape
    H = params["wh_f"].shape[0]
    D3 = params["uw"].shape[1]
    OUT_W = 128
    assert 1 + L <= OUT_W
    H2, G = 2 * H, 6 * H

    # keep mask from the f32 input (exact all-zero-row semantics, independent of bf16 cast)
    keep = (jnp.sum(jnp.abs(code), axis=2) != 0.0).astype(jnp.float32)[:, :, None]  # (B, L, 1)
    # time-major, bf16 input (wrapper-side transpose; halves HBM->VMEM bytes)
    x_tm = jnp.swapaxes(code, 0, 1).reshape(L * B, E).astype(jnp.bfloat16)

    # fused GRU params
    wi_g, bi_g, wh_g, bh_g = _fuse_gru_params(params)

    # BAFN params: weight_norm folded; heads collapsed (linear in heads when softmax=False)
    uw = params["uw"].astype(jnp.bfloat16)
    mw = params["mw"].astype(jnp.bfloat16)
    qsum = jnp.sum(params["qmat"], axis=0, keepdims=True)            # (1, 3D)
    qb = jnp.sum(params["qbias"], axis=0, keepdims=True)             # (1, 1)
    # fold pool (group sum), eval-BatchNorm and fc head into (w_eff, b_eff)
    inv = params["bn_g"] / jnp.sqrt(params["bn_v"] + 1e-5)           # (1, D)
    w_eff = (params["pool"] @ (inv.reshape(-1, 1) * params["fcw"])).reshape(1, D3)  # (1, 3D)
    b_eff = (params["bn_b"] - params["bn_m"] * inv) @ params["fcw"] + params["fcb"]  # (1, 1)

    packed = pl.pallas_call(
        _barlinedp_kernel,
        grid=(1,),
        in_specs=[_full_spec(x_tm.shape), _full_spec(keep.shape),
                  _full_spec(wi_g.shape), _full_spec(bi_g.shape),
                  _full_spec(wh_g.shape), _full_spec(bh_g.shape),
                  _full_spec(uw.shape), _full_spec(params["ub"].shape),
                  _full_spec(mw.shape), _full_spec(params["mb"].shape),
                  _full_spec(qsum.shape), _full_spec(qb.shape),
                  _full_spec(w_eff.shape), _full_spec(b_eff.shape)],
        out_specs=_full_spec((B, OUT_W)),
        out_shape=jax.ShapeDtypeStruct((B, OUT_W), jnp.float32),
        scratch_shapes=[
            pltpu.VMEM((L, B, G), jnp.float32),     # pre-selected gate inputs
            pltpu.VMEM((L, B, H2), jnp.float32),    # GRU contexts (never leave VMEM)
            pltpu.VMEM((B, L, D3), jnp.float32),    # batch-major l-projection
            pltpu.VMEM((B * L, H2), jnp.float32),   # batch-major context restage
            pltpu.VMEM((B, L, D3), jnp.float32),    # batch-major c-projection
        ],
        compiler_params=pltpu.CompilerParams(dimension_semantics=("arbitrary",)),
    )(x_tm, keep, wi_g, bi_g, wh_g, bh_g, uw, params["ub"], mw, params["mb"],
      qsum, qb, w_eff, b_eff)

    return packed[:, 0:1], packed[:, 1:1 + L]


# ----------------------------------------------------------------------------
# Pure-JAX f32 reference (same math, no Pallas) for a sanity check
# ----------------------------------------------------------------------------
def reference_forward(code, params):
    B, L, E = code.shape
    H = params["wh_f"].shape[0]

    def gru_dir(x, wi, wh, bi, bh):
        def step(h, x_t):
            gi = x_t @ wi + bi
            gh = h @ wh + bh
            r = jax.nn.sigmoid(gi[:, :H] + gh[:, :H])
            z = jax.nn.sigmoid(gi[:, H:2 * H] + gh[:, H:2 * H])
            n = jnp.tanh(gi[:, 2 * H:] + r * gh[:, 2 * H:])
            h_new = (1.0 - z) * n + z * h
            return h_new, h_new
        h0 = jnp.zeros((x.shape[0], H), jnp.float32)
        _, hs = jax.lax.scan(step, h0, jnp.swapaxes(x, 0, 1))
        return jnp.swapaxes(hs, 0, 1)

    out_f = gru_dir(code, params["wi_f"], params["wh_f"], params["bi_f"], params["bh_f"])
    out_b = gru_dir(code[:, ::-1], params["wi_b"], params["wh_b"],
                    params["bi_b"], params["bh_b"])[:, ::-1]
    ctx = jnp.concatenate([out_f, out_b], axis=-1)

    l_ = jax.nn.relu(code @ params["uw"] + params["ub"])
    c_ = jax.nn.relu(ctx @ params["mw"] + params["mb"])
    att = jnp.einsum('hk,bvk,bqk->bhvq', params["qmat"], l_, c_) \
        + params["qbias"][None, :, :, None]
    keep = (jnp.sum(jnp.abs(code), axis=2) != 0.0).astype(jnp.float32)
    att = att * keep[:, None, :, None]
    f = jnp.einsum('bvk,bhvq,bqk->bk', l_, att, c_)
    D3 = l_.shape[-1]
    D = D3 // 3
    pooled = f.reshape(B, D, 3).sum(-1)
    logits = (pooled - params["bn_m"]) / jnp.sqrt(params["bn_v"] + 1e-5) \
        * params["bn_g"] + params["bn_b"]
    scores = logits @ params["fcw"] + params["fcb"]
    diag = jnp.diagonal(att.sum(axis=1), axis1=1, axis2=2)
    return scores, diag


# ----------------------------------------------------------------------------
if __name__ == "__main__":
    B, L, E = 2, 8, 24          # files, lines per file, embed_dim
    H = 16                      # gru_hidden_dim (num_layers = 1)
    D = 32                      # bafn_output_dim
    k = 3
    h_out = 2
    C = 2 * H
    D3 = D * k

    key = jax.random.PRNGKey(0)
    keys = jax.random.split(key, 20)

    def w(kk, shape, scale=0.1):
        return (scale * jax.random.normal(kk, shape)).astype(jnp.float32)

    params = dict(
        # GRU (weights pre-transposed so kernels compute x @ W; gate order r,z,n)
        wi_f=w(keys[0], (E, 3 * H)), wh_f=w(keys[1], (H, 3 * H)),
        bi_f=w(keys[2], (1, 3 * H)), bh_f=w(keys[3], (1, 3 * H)),
        wi_b=w(keys[4], (E, 3 * H)), wh_b=w(keys[5], (H, 3 * H)),
        bi_b=w(keys[6], (1, 3 * H)), bh_b=w(keys[7], (1, 3 * H)),
        # BAFN FCNets (weight_norm folded into effective weights)
        uw=w(keys[8], (E, D3)), ub=w(keys[9], (1, D3)),
        mw=w(keys[10], (C, D3)), mb=w(keys[11], (1, D3)),
        # bilinear attention params (torch .normal_() init; outer weight_norm folded)
        qmat=jax.random.normal(keys[12], (h_out, D3)).astype(jnp.float32),
        qbias=jax.random.normal(keys[13], (h_out, 1)).astype(jnp.float32),
        # AvgPool1d(k, stride=k)*k expressed as a (3D, D) group-sum matrix
        pool=(jnp.arange(D3)[:, None] // k == jnp.arange(D)[None, :]).astype(jnp.float32),
        # BatchNorm1d defaults (eval mode)
        bn_g=jnp.ones((1, D), jnp.float32), bn_b=jnp.zeros((1, D), jnp.float32),
        bn_m=jnp.zeros((1, D), jnp.float32), bn_v=jnp.ones((1, D), jnp.float32),
        # fc head
        fcw=w(keys[14], (D, 1)), fcb=w(keys[15], (1, 1)),
    )

    # list of equal-length per-file line embeddings -> pad_sequence == stack
    code_list = [jax.random.normal(keys[16 + i], (L, E)).astype(jnp.float32)
                 for i in range(B)]
    code = jnp.stack(code_list, axis=0)   # (B, L, E)

    scores, sent_att_w = barlinedp_forward(code, params)
    scores = jax.block_until_ready(scores)
    sent_att_w = jax.block_until_ready(sent_att_w)

    ref_scores, ref_att = reference_forward(code, params)

    assert scores.shape == (B, 1) and sent_att_w.shape == (B, L)
    assert bool(jnp.all(jnp.isfinite(scores))) and bool(jnp.all(jnp.isfinite(sent_att_w)))
    # kernel uses bf16 MXU operands / inputs (f32 accumulation); reference is pure f32
    assert bool(jnp.allclose(scores, ref_scores, rtol=4e-2, atol=4e-2))
    assert bool(jnp.allclose(sent_att_w, ref_att, rtol=4e-2, atol=4e-2))
    print("KERNEL_OK")
</pallas_src>

<mosaic_0001>
module attributes {stable_mosaic.version = 11 : i64} {
  func.func @_barlinedp_kernel(%arg0: i32, %arg1: memref<16x24xbf16, #tpu.memory_space<vmem>>, %arg2: memref<2x8x1xf32, #tpu.memory_space<vmem>>, %arg3: memref<24x96xbf16, #tpu.memory_space<vmem>>, %arg4: memref<1x96xf32, #tpu.memory_space<vmem>>, %arg5: memref<32x96xbf16, #tpu.memory_space<vmem>>, %arg6: memref<1x96xf32, #tpu.memory_space<vmem>>, %arg7: memref<24x96xbf16, #tpu.memory_space<vmem>>, %arg8: memref<1x96xf32, #tpu.memory_space<vmem>>, %arg9: memref<32x96xbf16, #tpu.memory_space<vmem>>, %arg10: memref<1x96xf32, #tpu.memory_space<vmem>>, %arg11: memref<1x96xf32, #tpu.memory_space<vmem>>, %arg12: memref<1x1xf32, #tpu.memory_space<vmem>>, %arg13: memref<1x96xf32, #tpu.memory_space<vmem>>, %arg14: memref<1x1xf32, #tpu.memory_space<vmem>>, %arg15: memref<2x128xf32, #tpu.memory_space<vmem>>, %arg16: memref<8x2x96xf32, #tpu.memory_space<vmem>>, %arg17: memref<8x2x32xf32, #tpu.memory_space<vmem>>, %arg18: memref<2x8x96xf32, #tpu.memory_space<vmem>>, %arg19: memref<16x32xf32, #tpu.memory_space<vmem>>, %arg20: memref<2x8x96xf32, #tpu.memory_space<vmem>>) attributes {dimension_semantics = [#tpu.dimension_semantics<arbitrary>], iteration_bounds = array<i64: 1>, scalar_prefetch = 0 : i64, scratch_operands = 5 : i64, tpu.core_type = #tpu.core_type<tc>, window_params = [{pipeline_mode = #tpu.pipeline_mode<synchronous>, transform_indices = @transform_0, window_bounds = array<i64: 16, 24>}, {pipeline_mode = #tpu.pipeline_mode<synchronous>, transform_indices = @transform_1, window_bounds = array<i64: 2, 8, 1>}, {pipeline_mode = #tpu.pipeline_mode<synchronous>, transform_indices = @transform_2, window_bounds = array<i64: 24, 96>}, {pipeline_mode = #tpu.pipeline_mode<synchronous>, transform_indices = @transform_3, window_bounds = array<i64: 1, 96>}, {pipeline_mode = #tpu.pipeline_mode<synchronous>, transform_indices = @transform_4, window_bounds = array<i64: 32, 96>}, {pipeline_mode = #tpu.pipeline_mode<synchronous>, transform_indices = @transform_5, window_bounds = array<i64: 1, 96>}, {pipeline_mode = #tpu.pipeline_mode<synchronous>, transform_indices = @transform_6, window_bounds = array<i64: 24, 96>}, {pipeline_mode = #tpu.pipeline_mode<synchronous>, transform_indices = @transform_7, window_bounds = array<i64: 1, 96>}, {pipeline_mode = #tpu.pipeline_mode<synchronous>, transform_indices = @transform_8, window_bounds = array<i64: 32, 96>}, {pipeline_mode = #tpu.pipeline_mode<synchronous>, transform_indices = @transform_9, window_bounds = array<i64: 1, 96>}, {pipeline_mode = #tpu.pipeline_mode<synchronous>, transform_indices = @transform_10, window_bounds = array<i64: 1, 96>}, {pipeline_mode = #tpu.pipeline_mode<synchronous>, transform_indices = @transform_11, window_bounds = array<i64: 1, 1>}, {pipeline_mode = #tpu.pipeline_mode<synchronous>, transform_indices = @transform_12, window_bounds = array<i64: 1, 96>}, {pipeline_mode = #tpu.pipeline_mode<synchronous>, transform_indices = @transform_13, window_bounds = array<i64: 1, 1>}, {pipeline_mode = #tpu.pipeline_mode<synchronous>, transform_indices = @transform_14, window_bounds = array<i64: 2, 128>}]} {
    %c0 = arith.constant 0 : index
    %c0_0 = arith.constant 0 : index
    %0 = vector.load %arg1[%c0, %c0_0] : memref<16x24xbf16, #tpu.memory_space<vmem>>, vector<16x24xbf16>
    %c0_1 = arith.constant 0 : index
    %c0_2 = arith.constant 0 : index
    %1 = vector.load %arg3[%c0_1, %c0_2] : memref<24x96xbf16, #tpu.memory_space<vmem>>, vector<24x96xbf16>
    %cst = arith.constant dense<0.000000e+00> : vector<16x96xf32>
    %2 = tpu.matmul %0, %1, %cst {dimension_numbers = #tpu.dot_dimension_numbers<[1], [0], [0], [1], [0, 0, 1, 1], [], []>} : vector<16x24xbf16>, vector<24x96xbf16>, vector<16x96xf32> -> vector<16x96xf32>
    %c0_3 = arith.constant 0 : index
    %c0_4 = arith.constant 0 : index
    %3 = vector.load %arg4[%c0_3, %c0_4] : memref<1x96xf32, #tpu.memory_space<vmem>>, vector<1x96xf32>
    %4 = vector.broadcast %3 : vector<1x96xf32> to vector<16x96xf32>
    %5 = arith.addf %2, %4 : vector<16x96xf32>
    %c0_5 = arith.constant 0 : index
    %c0_6 = arith.constant 0 : index
    %6 = vector.load %arg7[%c0_5, %c0_6] : memref<24x96xbf16, #tpu.memory_space<vmem>>, vector<24x96xbf16>
    %cst_7 = arith.constant dense<0.000000e+00> : vector<16x96xf32>
    %7 = tpu.matmul %0, %6, %cst_7 {dimension_numbers = #tpu.dot_dimension_numbers<[1], [0], [0], [1], [0, 0, 1, 1], [], []>} : vector<16x24xbf16>, vector<24x96xbf16>, vector<16x96xf32> -> vector<16x96xf32>
    %c0_8 = arith.constant 0 : index
    %c0_9 = arith.constant 0 : index
    %8 = vector.load %arg8[%c0_8, %c0_9] : memref<1x96xf32, #tpu.memory_space<vmem>>, vector<1x96xf32>
    %9 = vector.broadcast %8 : vector<1x96xf32> to vector<16x96xf32>
    %10 = arith.addf %7, %9 : vector<16x96xf32>
    %cst_10 = arith.constant 0.000000e+00 : f32
    %11 = vector.broadcast %cst_10 : f32 to vector<16x96xf32>
    %12 = arith.maximumf %10, %11 : vector<16x96xf32>
    %13 = tpu.iota {dimensions = array<i32: 1>} : vector<1x96xi32>
    %c16_i32 = arith.constant 16 : i32
    %14 = vector.broadcast %c16_i32 : i32 to vector<1x96xi32>
    %15 = arith.cmpi slt, %13, %14 : vector<1x96xi32>
    %c32_i32 = arith.constant 32 : i32
    %16 = vector.broadcast %c32_i32 : i32 to vector<1x96xi32>
    %17 = arith.cmpi sge, %13, %16 : vector<1x96xi32>
    %c48_i32 = arith.constant 48 : i32
    %18 = vector.broadcast %c48_i32 : i32 to vector<1x96xi32>
    %19 = arith.cmpi slt, %13, %18 : vector<1x96xi32>
    %20 = arith.andi %17, %19 : vector<1x96xi1>
    %21 = arith.ori %15, %20 : vector<1x96xi1>
    %c64_i32 = arith.constant 64 : i32
    %22 = vector.broadcast %c64_i32 : i32 to vector<1x96xi32>
    %23 = arith.cmpi sge, %13, %22 : vector<1x96xi32>
    %c80_i32 = arith.constant 80 : i32
    %24 = vector.broadcast %c80_i32 : i32 to vector<1x96xi32>
    %25 = arith.cmpi slt, %13, %24 : vector<1x96xi32>
    %26 = arith.andi %23, %25 : vector<1x96xi1>
    %27 = arith.ori %21, %26 : vector<1x96xi1>
    %28 = vector.extract_strided_slice %5 {offsets = [0, 0], sizes = [2, 96], strides = [1, 1]} : vector<16x96xf32> to vector<2x96xf32>
    %29 = vector.extract_strided_slice %5 {offsets = [14, 0], sizes = [2, 96], strides = [1, 1]} : vector<16x96xf32> to vector<2x96xf32>
    %30 = vector.shape_cast %27 : vector<1x96xi1> to vector<1x96xi1>
    %31 = vector.broadcast %30 : vector<1x96xi1> to vector<2x96xi1>
    %32 = arith.select %31, %28, %29 : vector<2x96xi1>, vector<2x96xf32>
    %c0_11 = arith.constant 0 : index
    %c0_12 = arith.constant 0 : index
    %c0_13 = arith.constant 0 : index
    %33 = vector.load %arg16[%c0_11, %c0_12, %c0_13] : memref<8x2x96xf32, #tpu.memory_space<vmem>>, vector<1x2x96xf32>
    %34 = vector.shape_cast %33 : vector<1x2x96xf32> to vector<2x96xf32>
    %35 = vector.shape_cast %32 : vector<2x96xf32> to vector<1x2x96xf32>
    tpu.vector_store %arg16[%c0_11, %c0_12, %c0_13], %35 {strides = array<i32>} : memref<8x2x96xf32, #tpu.memory_space<vmem>>, vector<1x2x96xf32>,
    %36 = vector.extract_strided_slice %12 {offsets = [0, 0], sizes = [2, 96], strides = [1, 1]} : vector<16x96xf32> to vector<2x96xf32>
    %c0_14 = arith.constant 0 : index
    %c0_15 = arith.constant 0 : index
    %c0_16 = arith.constant 0 : index
    %37 = vector.load %arg18[%c0_14, %c0_15, %c0_16] : memref<2x8x96xf32, #tpu.memory_space<vmem>>, vector<2x1x96xf32>
    %38 = vector.shape_cast %37 : vector<2x1x96xf32> to vector<2x96xf32>
    %39 = vector.shape_cast %36 : vector<2x96xf32> to vector<2x1x96xf32>
    tpu.vector_store %arg18[%c0_14, %c0_15, %c0_16], %39 {strides = array<i32>} : memref<2x8x96xf32, #tpu.memory_space<vmem>>, vector<2x1x96xf32>,
    %40 = vector.extract_strided_slice %5 {offsets = [2, 0], sizes = [2, 96], strides = [1, 1]} : vector<16x96xf32> to vector<2x96xf32>
    %41 = vector.extract_strided_slice %5 {offsets = [12, 0], sizes = [2, 96], strides = [1, 1]} : vector<16x96xf32> to vector<2x96xf32>
    %42 = vector.shape_cast %27 : vector<1x96xi1> to vector<1x96xi1>
    %43 = vector.broadcast %42 : vector<1x96xi1> to vector<2x96xi1>
    %44 = arith.select %43, %40, %41 : vector<2x96xi1>, vector<2x96xf32>
    %c1 = arith.constant 1 : index
    %c0_17 = arith.constant 0 : index
    %c0_18 = arith.constant 0 : index
    %45 = vector.load %arg16[%c1, %c0_17, %c0_18] : memref<8x2x96xf32, #tpu.memory_space<vmem>>, vector<1x2x96xf32>
    %46 = vector.shape_cast %45 : vector<1x2x96xf32> to vector<2x96xf32>
    %47 = vector.shape_cast %44 : vector<2x96xf32> to vector<1x2x96xf32>
    tpu.vector_store %arg16[%c1, %c0_17, %c0_18], %47 {strides = array<i32>} : memref<8x2x96xf32, #tpu.memory_space<vmem>>, vector<1x2x96xf32>,
    %48 = vector.extract_strided_slice %12 {offsets = [2, 0], sizes = [2, 96], strides = [1, 1]} : vector<16x96xf32> to vector<2x96xf32>
    %c0_19 = arith.constant 0 : index
    %c1_20 = arith.constant 1 : index
    %c0_21 = arith.constant 0 : index
    %49 = vector.load %arg18[%c0_19, %c1_20, %c0_21] : memref<2x8x96xf32, #tpu.memory_space<vmem>>, vector<2x1x96xf32>
    %50 = vector.shape_cast %49 : vector<2x1x96xf32> to vector<2x96xf32>
    %51 = vector.shape_cast %48 : vector<2x96xf32> to vector<2x1x96xf32>
    tpu.vector_store %arg18[%c0_19, %c1_20, %c0_21], %51 {strides = array<i32>} : memref<2x8x96xf32, #tpu.memory_space<vmem>>, vector<2x1x96xf32>,
    %52 = vector.extract_strided_slice %5 {offsets = [4, 0], sizes = [2, 96], strides = [1, 1]} : vector<16x96xf32> to vector<2x96xf32>
    %53 = vector.extract_strided_slice %5 {offsets = [10, 0], sizes = [2, 96], strides = [1, 1]} : vector<16x96xf32> to vector<2x96xf32>
    %54 = vector.shape_cast %27 : vector<1x96xi1> to vector<1x96xi1>
    %55 = vector.broadcast %54 : vector<1x96xi1> to vector<2x96xi1>
    %56 = arith.select %55, %52, %53 : vector<2x96xi1>, vector<2x96xf32>
    %c2 = arith.constant 2 : index
    %c0_22 = arith.constant 0 : index
    %c0_23 = arith.constant 0 : index
    %57 = vector.load %arg16[%c2, %c0_22, %c0_23] : memref<8x2x96xf32, #tpu.memory_space<vmem>>, vector<1x2x96xf32>
    %58 = vector.shape_cast %57 : vector<1x2x96xf32> to vector<2x96xf32>
    %59 = vector.shape_cast %56 : vector<2x96xf32> to vector<1x2x96xf32>
    tpu.vector_store %arg16[%c2, %c0_22, %c0_23], %59 {strides = array<i32>} : memref<8x2x96xf32, #tpu.memory_space<vmem>>, vector<1x2x96xf32>,
    %60 = vector.extract_strided_slice %12 {offsets = [4, 0], sizes = [2, 96], strides = [1, 1]} : vector<16x96xf32> to vector<2x96xf32>
    %c0_24 = arith.constant 0 : index
    %c2_25 = arith.constant 2 : index
    %c0_26 = arith.constant 0 : index
    %61 = vector.load %arg18[%c0_24, %c2_25, %c0_26] : memref<2x8x96xf32, #tpu.memory_space<vmem>>, vector<2x1x96xf32>
    %62 = vector.shape_cast %61 : vector<2x1x96xf32> to vector<2x96xf32>
    %63 = vector.shape_cast %60 : vector<2x96xf32> to vector<2x1x96xf32>
    tpu.vector_store %arg18[%c0_24, %c2_25, %c0_26], %63 {strides = array<i32>} : memref<2x8x96xf32, #tpu.memory_space<vmem>>, vector<2x1x96xf32>,
    %64 = vector.extract_strided_slice %5 {offsets = [6, 0], sizes = [2, 96], strides = [1, 1]} : vector<16x96xf32> to vector<2x96xf32>
    %65 = vector.extract_strided_slice %5 {offsets = [8, 0], sizes = [2, 96], strides = [1, 1]} : vector<16x96xf32> to vector<2x96xf32>
    %66 = vector.shape_cast %27 : vector<1x96xi1> to vector<1x96xi1>
    %67 = vector.broadcast %66 : vector<1x96xi1> to vector<2x96xi1>
    %68 = arith.select %67, %64, %65 : vector<2x96xi1>, vector<2x96xf32>
    %c3 = arith.constant 3 : index
    %c0_27 = arith.constant 0 : index
    %c0_28 = arith.constant 0 : index
    %69 = vector.load %arg16[%c3, %c0_27, %c0_28] : memref<8x2x96xf32, #tpu.memory_space<vmem>>, vector<1x2x96xf32>
    %70 = vector.shape_cast %69 : vector<1x2x96xf32> to vector<2x96xf32>
    %71 = vector.shape_cast %68 : vector<2x96xf32> to vector<1x2x96xf32>
    tpu.vector_store %arg16[%c3, %c0_27, %c0_28], %71 {strides = array<i32>} : memref<8x2x96xf32, #tpu.memory_space<vmem>>, vector<1x2x96xf32>,
    %72 = vector.extract_strided_slice %12 {offsets = [6, 0], sizes = [2, 96], strides = [1, 1]} : vector<16x96xf32> to vector<2x96xf32>
    %c0_29 = arith.constant 0 : index
    %c3_30 = arith.constant 3 : index
    %c0_31 = arith.constant 0 : index
    %73 = vector.load %arg18[%c0_29, %c3_30, %c0_31] : memref<2x8x96xf32, #tpu.memory_space<vmem>>, vector<2x1x96xf32>
    %74 = vector.shape_cast %73 : vector<2x1x96xf32> to vector<2x96xf32>
    %75 = vector.shape_cast %72 : vector<2x96xf32> to vector<2x1x96xf32>
    tpu.vector_store %arg18[%c0_29, %c3_30, %c0_31], %75 {strides = array<i32>} : memref<2x8x96xf32, #tpu.memory_space<vmem>>, vector<2x1x96xf32>,
    %76 = vector.extract_strided_slice %5 {offsets = [8, 0], sizes = [2, 96], strides = [1, 1]} : vector<16x96xf32> to vector<2x96xf32>
    %77 = vector.extract_strided_slice %5 {offsets = [6, 0], sizes = [2, 96], strides = [1, 1]} : vector<16x96xf32> to vector<2x96xf32>
    %78 = vector.shape_cast %27 : vector<1x96xi1> to vector<1x96xi1>
    %79 = vector.broadcast %78 : vector<1x96xi1> to vector<2x96xi1>
    %80 = arith.select %79, %76, %77 : vector<2x96xi1>, vector<2x96xf32>
    %c4 = arith.constant 4 : index
    %c0_32 = arith.constant 0 : index
    %c0_33 = arith.constant 0 : index
    %81 = vector.load %arg16[%c4, %c0_32, %c0_33] : memref<8x2x96xf32, #tpu.memory_space<vmem>>, vector<1x2x96xf32>
    %82 = vector.shape_cast %81 : vector<1x2x96xf32> to vector<2x96xf32>
    %83 = vector.shape_cast %80 : vector<2x96xf32> to vector<1x2x96xf32>
    tpu.vector_store %arg16[%c4, %c0_32, %c0_33], %83 {strides = array<i32>} : memref<8x2x96xf32, #tpu.memory_space<vmem>>, vector<1x2x96xf32>,
    %84 = vector.extract_strided_slice %12 {offsets = [8, 0], sizes = [2, 96], strides = [1, 1]} : vector<16x96xf32> to vector<2x96xf32>
    %c0_34 = arith.constant 0 : index
    %c4_35 = arith.constant 4 : index
    %c0_36 = arith.constant 0 : index
    %85 = vector.load %arg18[%c0_34, %c4_35, %c0_36] : memref<2x8x96xf32, #tpu.memory_space<vmem>>, vector<2x1x96xf32>
    %86 = vector.shape_cast %85 : vector<2x1x96xf32> to vector<2x96xf32>
    %87 = vector.shape_cast %84 : vector<2x96xf32> to vector<2x1x96xf32>
    tpu.vector_store %arg18[%c0_34, %c4_35, %c0_36], %87 {strides = array<i32>} : memref<2x8x96xf32, #tpu.memory_space<vmem>>, vector<2x1x96xf32>,
    %88 = vector.extract_strided_slice %5 {offsets = [10, 0], sizes = [2, 96], strides = [1, 1]} : vector<16x96xf32> to vector<2x96xf32>
    %89 = vector.extract_strided_slice %5 {offsets = [4, 0], sizes = [2, 96], strides = [1, 1]} : vector<16x96xf32> to vector<2x96xf32>
    %90 = vector.shape_cast %27 : vector<1x96xi1> to vector<1x96xi1>
    %91 = vector.broadcast %90 : vector<1x96xi1> to vector<2x96xi1>
    %92 = arith.select %91, %88, %89 : vector<2x96xi1>, vector<2x96xf32>
    %c5 = arith.constant 5 : index
    %c0_37 = arith.constant 0 : index
    %c0_38 = arith.constant 0 : index
    %93 = vector.load %arg16[%c5, %c0_37, %c0_38] : memref<8x2x96xf32, #tpu.memory_space<vmem>>, vector<1x2x96xf32>
    %94 = vector.shape_cast %93 : vector<1x2x96xf32> to vector<2x96xf32>
    %95 = vector.shape_cast %92 : vector<2x96xf32> to vector<1x2x96xf32>
    tpu.vector_store %arg16[%c5, %c0_37, %c0_38], %95 {strides = array<i32>} : memref<8x2x96xf32, #tpu.memory_space<vmem>>, vector<1x2x96xf32>,
    %96 = vector.extract_strided_slice %12 {offsets = [10, 0], sizes = [2, 96], strides = [1, 1]} : vector<16x96xf32> to vector<2x96xf32>
    %c0_39 = arith.constant 0 : index
    %c5_40 = arith.constant 5 : index
    %c0_41 = arith.constant 0 : index
    %97 = vector.load %arg18[%c0_39, %c5_40, %c0_41] : memref<2x8x96xf32, #tpu.memory_space<vmem>>, vector<2x1x96xf32>
    %98 = vector.shape_cast %97 : vector<2x1x96xf32> to vector<2x96xf32>
    %99 = vector.shape_cast %96 : vector<2x96xf32> to vector<2x1x96xf32>
    tpu.vector_store %arg18[%c0_39, %c5_40, %c0_41], %99 {strides = array<i32>} : memref<2x8x96xf32, #tpu.memory_space<vmem>>, vector<2x1x96xf32>,
    %100 = vector.extract_strided_slice %5 {offsets = [12, 0], sizes = [2, 96], strides = [1, 1]} : vector<16x96xf32> to vector<2x96xf32>
    %101 = vector.extract_strided_slice %5 {offsets = [2, 0], sizes = [2, 96], strides = [1, 1]} : vector<16x96xf32> to vector<2x96xf32>
    %102 = vector.shape_cast %27 : vector<1x96xi1> to vector<1x96xi1>
    %103 = vector.broadcast %102 : vector<1x96xi1> to vector<2x96xi1>
    %104 = arith.select %103, %100, %101 : vector<2x96xi1>, vector<2x96xf32>
    %c6 = arith.constant 6 : index
    %c0_42 = arith.constant 0 : index
    %c0_43 = arith.constant 0 : index
    %105 = vector.load %arg16[%c6, %c0_42, %c0_43] : memref<8x2x96xf32, #tpu.memory_space<vmem>>, vector<1x2x96xf32>
    %106 = vector.shape_cast %105 : vector<1x2x96xf32> to vector<2x96xf32>
    %107 = vector.shape_cast %104 : vector<2x96xf32> to vector<1x2x96xf32>
    tpu.vector_store %arg16[%c6, %c0_42, %c0_43], %107 {strides = array<i32>} : memref<8x2x96xf32, #tpu.memory_space<vmem>>, vector<1x2x96xf32>,
    %108 = vector.extract_strided_slice %12 {offsets = [12, 0], sizes = [2, 96], strides = [1, 1]} : vector<16x96xf32> to vector<2x96xf32>
    %c0_44 = arith.constant 0 : index
    %c6_45 = arith.constant 6 : index
    %c0_46 = arith.constant 0 : index
    %109 = vector.load %arg18[%c0_44, %c6_45, %c0_46] : memref<2x8x96xf32, #tpu.memory_space<vmem>>, vector<2x1x96xf32>
    %110 = vector.shape_cast %109 : vector<2x1x96xf32> to vector<2x96xf32>
    %111 = vector.shape_cast %108 : vector<2x96xf32> to vector<2x1x96xf32>
    tpu.vector_store %arg18[%c0_44, %c6_45, %c0_46], %111 {strides = array<i32>} : memref<2x8x96xf32, #tpu.memory_space<vmem>>, vector<2x1x96xf32>,
    %112 = vector.extract_strided_slice %5 {offsets = [14, 0], sizes = [2, 96], strides = [1, 1]} : vector<16x96xf32> to vector<2x96xf32>
    %113 = vector.extract_strided_slice %5 {offsets = [0, 0], sizes = [2, 96], strides = [1, 1]} : vector<16x96xf32> to vector<2x96xf32>
    %114 = vector.shape_cast %27 : vector<1x96xi1> to vector<1x96xi1>
    %115 = vector.broadcast %114 : vector<1x96xi1> to vector<2x96xi1>
    %116 = arith.select %115, %112, %113 : vector<2x96xi1>, vector<2x96xf32>
    %c7 = arith.constant 7 : index
    %c0_47 = arith.constant 0 : index
    %c0_48 = arith.constant 0 : index
    %117 = vector.load %arg16[%c7, %c0_47, %c0_48] : memref<8x2x96xf32, #tpu.memory_space<vmem>>, vector<1x2x96xf32>
    %118 = vector.shape_cast %117 : vector<1x2x96xf32> to vector<2x96xf32>
    %119 = vector.shape_cast %116 : vector<2x96xf32> to vector<1x2x96xf32>
    tpu.vector_store %arg16[%c7, %c0_47, %c0_48], %119 {strides = array<i32>} : memref<8x2x96xf32, #tpu.memory_space<vmem>>, vector<1x2x96xf32>,
    %120 = vector.extract_strided_slice %12 {offsets = [14, 0], sizes = [2, 96], strides = [1, 1]} : vector<16x96xf32> to vector<2x96xf32>
    %c0_49 = arith.constant 0 : index
    %c7_50 = arith.constant 7 : index
    %c0_51 = arith.constant 0 : index
    %121 = vector.load %arg18[%c0_49, %c7_50, %c0_51] : memref<2x8x96xf32, #tpu.memory_space<vmem>>, vector<2x1x96xf32>
    %122 = vector.shape_cast %121 : vector<2x1x96xf32> to vector<2x96xf32>
    %123 = vector.shape_cast %120 : vector<2x96xf32> to vector<2x1x96xf32>
    tpu.vector_store %arg18[%c0_49, %c7_50, %c0_51], %123 {strides = array<i32>} : memref<2x8x96xf32, #tpu.memory_space<vmem>>, vector<2x1x96xf32>,
    %c0_52 = arith.constant 0 : index
    %c0_53 = arith.constant 0 : index
    %124 = vector.load %arg5[%c0_52, %c0_53] : memref<32x96xbf16, #tpu.memory_space<vmem>>, vector<32x96xbf16>
    %c0_54 = arith.constant 0 : index
    %c0_55 = arith.constant 0 : index
    %125 = vector.load %arg6[%c0_54, %c0_55] : memref<1x96xf32, #tpu.memory_space<vmem>>, vector<1x96xf32>
    %126 = vector.shape_cast %125 : vector<1x96xf32> to vector<1x96xf32>
    %127 = vector.broadcast %126 : vector<1x96xf32> to vector<2x96xf32>
    %cst_56 = arith.constant 0.000000e+00 : f32
    %128 = vector.broadcast %cst_56 : f32 to vector<2x32xf32>
    %c0_i32 = arith.constant 0 : i32
    %129 = arith.index_cast %c0_i32 : i32 to index
    %c0_57 = arith.constant 0 : index
    %c0_58 = arith.constant 0 : index
    %130 = vector.load %arg16[%129, %c0_57, %c0_58] : memref<8x2x96xf32, #tpu.memory_space<vmem>>, vector<1x2x96xf32>
    %131 = vector.shape_cast %130 : vector<1x2x96xf32> to vector<2x96xf32>
    %132 = arith.truncf %128 : vector<2x32xf32> to vector<2x32xbf16>
    %cst_59 = arith.constant dense<0.000000e+00> : vector<2x96xf32>
    %133 = tpu.matmul %132, %124, %cst_59 {dimension_numbers = #tpu.dot_dimension_numbers<[1], [0], [0], [1], [0, 0, 1, 1], [], []>} : vector<2x32xbf16>, vector<32x96xbf16>, vector<2x96xf32> -> vector<2x96xf32>
    %134 = arith.addf %133, %127 : vector<2x96xf32>
    %135 = vector.extract_strided_slice %131 {offsets = [0, 0], sizes = [2, 32], strides = [1, 1]} : vector<2x96xf32> to vector<2x32xf32>
    %136 = vector.extract_strided_slice %134 {offsets = [0, 0], sizes = [2, 32], strides = [1, 1]} : vector<2x96xf32> to vector<2x32xf32>
    %137 = arith.addf %135, %136 : vector<2x32xf32>
    %138 = arith.negf %137 : vector<2x32xf32>
    %139 = math.exp %138 : vector<2x32xf32>
    %cst_60 = arith.constant 1.000000e+00 : f32
    %140 = vector.broadcast %cst_60 : f32 to vector<2x32xf32>
    %141 = arith.addf %140, %139 : vector<2x32xf32>
    %142 = arith.divf %140, %141 : vector<2x32xf32>
    %143 = vector.extract_strided_slice %131 {offsets = [0, 32], sizes = [2, 32], strides = [1, 1]} : vector<2x96xf32> to vector<2x32xf32>
    %144 = vector.extract_strided_slice %134 {offsets = [0, 32], sizes = [2, 32], strides = [1, 1]} : vector<2x96xf32> to vector<2x32xf32>
    %145 = arith.addf %143, %144 : vector<2x32xf32>
    %146 = arith.negf %145 : vector<2x32xf32>
    %147 = math.exp %146 : vector<2x32xf32>
    %cst_61 = arith.constant 1.000000e+00 : f32
    %148 = vector.broadcast %cst_61 : f32 to vector<2x32xf32>
    %149 = arith.addf %148, %147 : vector<2x32xf32>
    %150 = arith.divf %148, %149 : vector<2x32xf32>
    %151 = vector.extract_strided_slice %131 {offsets = [0, 64], sizes = [2, 32], strides = [1, 1]} : vector<2x96xf32> to vector<2x32xf32>
    %152 = vector.extract_strided_slice %134 {offsets = [0, 64], sizes = [2, 32], strides = [1, 1]} : vector<2x96xf32> to vector<2x32xf32>
    %153 = arith.mulf %142, %152 : vector<2x32xf32>
    %154 = arith.addf %151, %153 : vector<2x32xf32>
    %155 = math.tanh %154 : vector<2x32xf32>
    %cst_62 = arith.constant 1.000000e+00 : f32
    %156 = vector.broadcast %cst_62 : f32 to vector<2x32xf32>
    %157 = arith.subf %156, %150 : vector<2x32xf32>
    %158 = arith.mulf %157, %155 : vector<2x32xf32>
    %159 = arith.mulf %150, %128 : vector<2x32xf32>
    %160 = arith.addf %158, %159 : vector<2x32xf32>
    %161 = vector.extract_strided_slice %160 {offsets = [0, 0], sizes = [2, 16], strides = [1, 1]} : vector<2x32xf32> to vector<2x16xf32>
    %162 = arith.index_cast %c0_i32 : i32 to index
    %c0_63 = arith.constant 0 : index
    %c0_64 = arith.constant 0 : index
    %163 = vector.load %arg17[%162, %c0_63, %c0_64] : memref<8x2x32xf32, #tpu.memory_space<vmem>>, vector<1x2x16xf32>
    %164 = vector.shape_cast %163 : vector<1x2x16xf32> to vector<2x16xf32>
    %165 = vector.shape_cast %161 : vector<2x16xf32> to vector<1x2x16xf32>
    tpu.vector_store %arg17[%162, %c0_63, %c0_64], %165 {strides = array<i32>} : memref<8x2x32xf32, #tpu.memory_space<vmem>>, vector<1x2x16xf32>,
    %166 = vector.extract_strided_slice %160 {offsets = [0, 16], sizes = [2, 16], strides = [1, 1]} : vector<2x32xf32> to vector<2x16xf32>
    %c7_i32 = arith.constant 7 : i32
    %167 = arith.subi %c7_i32, %c0_i32 : i32
    %168 = arith.index_cast %167 : i32 to index
    %c0_65 = arith.constant 0 : index
    %c16 = arith.constant 16 : index
    %169 = vector.load %arg17[%168, %c0_65, %c16] : memref<8x2x32xf32, #tpu.memory_space<vmem>>, vector<1x2x16xf32>
    %170 = vector.shape_cast %169 : vector<1x2x16xf32> to vector<2x16xf32>
    %171 = vector.shape_cast %166 : vector<2x16xf32> to vector<1x2x16xf32>
    tpu.vector_store %arg17[%168, %c0_65, %c16], %171 {strides = array<i32>} : memref<8x2x32xf32, #tpu.memory_space<vmem>>, vector<1x2x16xf32>,
    %c1_i32 = arith.constant 1 : i32
    %172 = arith.index_cast %c1_i32 : i32 to index
    %c0_66 = arith.constant 0 : index
    %c0_67 = arith.constant 0 : index
    %173 = vector.load %arg16[%172, %c0_66, %c0_67] : memref<8x2x96xf32, #tpu.memory_space<vmem>>, vector<1x2x96xf32>
    %174 = vector.shape_cast %173 : vector<1x2x96xf32> to vector<2x96xf32>
    %175 = arith.truncf %160 : vector<2x32xf32> to vector<2x32xbf16>
    %cst_68 = arith.constant dense<0.000000e+00> : vector<2x96xf32>
    %176 = tpu.matmul %175, %124, %cst_68 {dimension_numbers = #tpu.dot_dimension_numbers<[1], [0], [0], [1], [0, 0, 1, 1], [], []>} : vector<2x32xbf16>, vector<32x96xbf16>, vector<2x96xf32> -> vector<2x96xf32>
    %177 = arith.addf %176, %127 : vector<2x96xf32>
    %178 = vector.extract_strided_slice %174 {offsets = [0, 0], sizes = [2, 32], strides = [1, 1]} : vector<2x96xf32> to vector<2x32xf32>
    %179 = vector.extract_strided_slice %177 {offsets = [0, 0], sizes = [2, 32], strides = [1, 1]} : vector<2x96xf32> to vector<2x32xf32>
    %180 = arith.addf %178, %179 : vector<2x32xf32>
    %181 = arith.negf %180 : vector<2x32xf32>
    %182 = math.exp %181 : vector<2x32xf32>
    %cst_69 = arith.constant 1.000000e+00 : f32
    %183 = vector.broadcast %cst_69 : f32 to vector<2x32xf32>
    %184 = arith.addf %183, %182 : vector<2x32xf32>
    %185 = arith.divf %183, %184 : vector<2x32xf32>
    %186 = vector.extract_strided_slice %174 {offsets = [0, 32], sizes = [2, 32], strides = [1, 1]} : vector<2x96xf32> to vector<2x32xf32>
    %187 = vector.extract_strided_slice %177 {offsets = [0, 32], sizes = [2, 32], strides = [1, 1]} : vector<2x96xf32> to vector<2x32xf32>
    %188 = arith.addf %186, %187 : vector<2x32xf32>
    %189 = arith.negf %188 : vector<2x32xf32>
    %190 = math.exp %189 : vector<2x32xf32>
    %cst_70 = arith.constant 1.000000e+00 : f32
    %191 = vector.broadcast %cst_70 : f32 to vector<2x32xf32>
    %192 = arith.addf %191, %190 : vector<2x32xf32>
    %193 = arith.divf %191, %192 : vector<2x32xf32>
    %194 = vector.extract_strided_slice %174 {offsets = [0, 64], sizes = [2, 32], strides = [1, 1]} : vector<2x96xf32> to vector<2x32xf32>
    %195 = vector.extract_strided_slice %177 {offsets = [0, 64], sizes = [2, 32], strides = [1, 1]} : vector<2x96xf32> to vector<2x32xf32>
    %196 = arith.mulf %185, %195 : vector<2x32xf32>
    %197 = arith.addf %194, %196 : vector<2x32xf32>
    %198 = math.tanh %197 : vector<2x32xf32>
    %cst_71 = arith.constant 1.000000e+00 : f32
    %199 = vector.broadcast %cst_71 : f32 to vector<2x32xf32>
    %200 = arith.subf %199, %193 : vector<2x32xf32>
    %201 = arith.mulf %200, %198 : vector<2x32xf32>
    %202 = arith.mulf %193, %160 : vector<2x32xf32>
    %203 = arith.addf %201, %202 : vector<2x32xf32>
    %204 = vector.extract_strided_slice %203 {offsets = [0, 0], sizes = [2, 16], strides = [1, 1]} : vector<2x32xf32> to vector<2x16xf32>
    %205 = arith.index_cast %c1_i32 : i32 to index
    %c0_72 = arith.constant 0 : index
    %c0_73 = arith.constant 0 : index
    %206 = vector.load %arg17[%205, %c0_72, %c0_73] : memref<8x2x32xf32, #tpu.memory_space<vmem>>, vector<1x2x16xf32>
    %207 = vector.shape_cast %206 : vector<1x2x16xf32> to vector<2x16xf32>
    %208 = vector.shape_cast %204 : vector<2x16xf32> to vector<1x2x16xf32>
    tpu.vector_store %arg17[%205, %c0_72, %c0_73], %208 {strides = array<i32>} : memref<8x2x32xf32, #tpu.memory_space<vmem>>, vector<1x2x16xf32>,
    %209 = vector.extract_strided_slice %203 {offsets = [0, 16], sizes = [2, 16], strides = [1, 1]} : vector<2x32xf32> to vector<2x16xf32>
    %c7_i32_74 = arith.constant 7 : i32
    %210 = arith.subi %c7_i32_74, %c1_i32 : i32
    %211 = arith.index_cast %210 : i32 to index
    %c0_75 = arith.constant 0 : index
    %c16_76 = arith.constant 16 : index
    %212 = vector.load %arg17[%211, %c0_75, %c16_76] : memref<8x2x32xf32, #tpu.memory_space<vmem>>, vector<1x2x16xf32>
    %213 = vector.shape_cast %212 : vector<1x2x16xf32> to vector<2x16xf32>
    %214 = vector.shape_cast %209 : vector<2x16xf32> to vector<1x2x16xf32>
    tpu.vector_store %arg17[%211, %c0_75, %c16_76], %214 {strides = array<i32>} : memref<8x2x32xf32, #tpu.memory_space<vmem>>, vector<1x2x16xf32>,
    %c2_i32 = arith.constant 2 : i32
    %215 = arith.index_cast %c2_i32 : i32 to index
    %c0_77 = arith.constant 0 : index
    %c0_78 = arith.constant 0 : index
    %216 = vector.load %arg16[%215, %c0_77, %c0_78] : memref<8x2x96xf32, #tpu.memory_space<vmem>>, vector<1x2x96xf32>
    %217 = vector.shape_cast %216 : vector<1x2x96xf32> to vector<2x96xf32>
    %218 = arith.truncf %203 : vector<2x32xf32> to vector<2x32xbf16>
    %cst_79 = arith.constant dense<0.000000e+00> : vector<2x96xf32>
    %219 = tpu.matmul %218, %124, %cst_79 {dimension_numbers = #tpu.dot_dimension_numbers<[1], [0], [0], [1], [0, 0, 1, 1], [], []>} : vector<2x32xbf16>, vector<32x96xbf16>, vector<2x96xf32> -> vector<2x96xf32>
    %220 = arith.addf %219, %127 : vector<2x96xf32>
    %221 = vector.extract_strided_slice %217 {offsets = [0, 0], sizes = [2, 32], strides = [1, 1]} : vector<2x96xf32> to vector<2x32xf32>
    %222 = vector.extract_strided_slice %220 {offsets = [0, 0], sizes = [2, 32], strides = [1, 1]} : vector<2x96xf32> to vector<2x32xf32>
    %223 = arith.addf %221, %222 : vector<2x32xf32>
    %224 = arith.negf %223 : vector<2x32xf32>
    %225 = math.exp %224 : vector<2x32xf32>
    %cst_80 = arith.constant 1.000000e+00 : f32
    %226 = vector.broadcast %cst_80 : f32 to vector<2x32xf32>
    %227 = arith.addf %226, %225 : vector<2x32xf32>
    %228 = arith.divf %226, %227 : vector<2x32xf32>
    %229 = vector.extract_strided_slice %217 {offsets = [0, 32], sizes = [2, 32], strides = [1, 1]} : vector<2x96xf32> to vector<2x32xf32>
    %230 = vector.extract_strided_slice %220 {offsets = [0, 32], sizes = [2, 32], strides = [1, 1]} : vector<2x96xf32> to vector<2x32xf32>
    %231 = arith.addf %229, %230 : vector<2x32xf32>
    %232 = arith.negf %231 : vector<2x32xf32>
    %233 = math.exp %232 : vector<2x32xf32>
    %cst_81 = arith.constant 1.000000e+00 : f32
    %234 = vector.broadcast %cst_81 : f32 to vector<2x32xf32>
    %235 = arith.addf %234, %233 : vector<2x32xf32>
    %236 = arith.divf %234, %235 : vector<2x32xf32>
    %237 = vector.extract_strided_slice %217 {offsets = [0, 64], sizes = [2, 32], strides = [1, 1]} : vector<2x96xf32> to vector<2x32xf32>
    %238 = vector.extract_strided_slice %220 {offsets = [0, 64], sizes = [2, 32], strides = [1, 1]} : vector<2x96xf32> to vector<2x32xf32>
    %239 = arith.mulf %228, %238 : vector<2x32xf32>
    %240 = arith.addf %237, %239 : vector<2x32xf32>
    %241 = math.tanh %240 : vector<2x32xf32>
    %cst_82 = arith.constant 1.000000e+00 : f32
    %242 = vector.broadcast %cst_82 : f32 to vector<2x32xf32>
    %243 = arith.subf %242, %236 : vector<2x32xf32>
    %244 = arith.mulf %243, %241 : vector<2x32xf32>
    %245 = arith.mulf %236, %203 : vector<2x32xf32>
    %246 = arith.addf %244, %245 : vector<2x32xf32>
    %247 = vector.extract_strided_slice %246 {offsets = [0, 0], sizes = [2, 16], strides = [1, 1]} : vector<2x32xf32> to vector<2x16xf32>
    %248 = arith.index_cast %c2_i32 : i32 to index
    %c0_83 = arith.constant 0 : index
    %c0_84 = arith.constant 0 : index
    %249 = vector.load %arg17[%248, %c0_83, %c0_84] : memref<8x2x32xf32, #tpu.memory_space<vmem>>, vector<1x2x16xf32>
    %250 = vector.shape_cast %249 : vector<1x2x16xf32> to vector<2x16xf32>
    %251 = vector.shape_cast %247 : vector<2x16xf32> to vector<1x2x16xf32>
    tpu.vector_store %arg17[%248, %c0_83, %c0_84], %251 {strides = array<i32>} : memref<8x2x32xf32, #tpu.memory_space<vmem>>, vector<1x2x16xf32>,
    %252 = vector.extract_strided_slice %246 {offsets = [0, 16], sizes = [2, 16], strides = [1, 1]} : vector<2x32xf32> to vector<2x16xf32>
    %c7_i32_85 = arith.constant 7 : i32
    %253 = arith.subi %c7_i32_85, %c2_i32 : i32
    %254 = arith.index_cast %253 : i32 to index
    %c0_86 = arith.constant 0 : index
    %c16_87 = arith.constant 16 : index
    %255 = vector.load %arg17[%254, %c0_86, %c16_87] : memref<8x2x32xf32, #tpu.memory_space<vmem>>, vector<1x2x16xf32>
    %256 = vector.shape_cast %255 : vector<1x2x16xf32> to vector<2x16xf32>
    %257 = vector.shape_cast %252 : vector<2x16xf32> to vector<1x2x16xf32>
    tpu.vector_store %arg17[%254, %c0_86, %c16_87], %257 {strides = array<i32>} : memref<8x2x32xf32, #tpu.memory_space<vmem>>, vector<1x2x16xf32>,
    %c3_i32 = arith.constant 3 : i32
    %258 = arith.index_cast %c3_i32 : i32 to index
    %c0_88 = arith.constant 0 : index
    %c0_89 = arith.constant 0 : index
    %259 = vector.load %arg16[%258, %c0_88, %c0_89] : memref<8x2x96xf32, #tpu.memory_space<vmem>>, vector<1x2x96xf32>
    %260 = vector.shape_cast %259 : vector<1x2x96xf32> to vector<2x96xf32>
    %261 = arith.truncf %246 : vector<2x32xf32> to vector<2x32xbf16>
    %cst_90 = arith.constant dense<0.000000e+00> : vector<2x96xf32>
    %262 = tpu.matmul %261, %124, %cst_90 {dimension_numbers = #tpu.dot_dimension_numbers<[1], [0], [0], [1], [0, 0, 1, 1], [], []>} : vector<2x32xbf16>, vector<32x96xbf16>, vector<2x96xf32> -> vector<2x96xf32>
    %263 = arith.addf %262, %127 : vector<2x96xf32>
    %264 = vector.extract_strided_slice %260 {offsets = [0, 0], sizes = [2, 32], strides = [1, 1]} : vector<2x96xf32> to vector<2x32xf32>
    %265 = vector.extract_strided_slice %263 {offsets = [0, 0], sizes = [2, 32], strides = [1, 1]} : vector<2x96xf32> to vector<2x32xf32>
    %266 = arith.addf %264, %265 : vector<2x32xf32>
    %267 = arith.negf %266 : vector<2x32xf32>
    %268 = math.exp %267 : vector<2x32xf32>
    %cst_91 = arith.constant 1.000000e+00 : f32
    %269 = vector.broadcast %cst_91 : f32 to vector<2x32xf32>
    %270 = arith.addf %269, %268 : vector<2x32xf32>
    %271 = arith.divf %269, %270 : vector<2x32xf32>
    %272 = vector.extract_strided_slice %260 {offsets = [0, 32], sizes = [2, 32], strides = [1, 1]} : vector<2x96xf32> to vector<2x32xf32>
    %273 = vector.extract_strided_slice %263 {offsets = [0, 32], sizes = [2, 32], strides = [1, 1]} : vector<2x96xf32> to vector<2x32xf32>
    %274 = arith.addf %272, %273 : vector<2x32xf32>
    %275 = arith.negf %274 : vector<2x32xf32>
    %276 = math.exp %275 : vector<2x32xf32>
    %cst_92 = arith.constant 1.000000e+00 : f32
    %277 = vector.broadcast %cst_92 : f32 to vector<2x32xf32>
    %278 = arith.addf %277, %276 : vector<2x32xf32>
    %279 = arith.divf %277, %278 : vector<2x32xf32>
    %280 = vector.extract_strided_slice %260 {offsets = [0, 64], sizes = [2, 32], strides = [1, 1]} : vector<2x96xf32> to vector<2x32xf32>
    %281 = vector.extract_strided_slice %263 {offsets = [0, 64], sizes = [2, 32], strides = [1, 1]} : vector<2x96xf32> to vector<2x32xf32>
    %282 = arith.mulf %271, %281 : vector<2x32xf32>
    %283 = arith.addf %280, %282 : vector<2x32xf32>
    %284 = math.tanh %283 : vector<2x32xf32>
    %cst_93 = arith.constant 1.000000e+00 : f32
    %285 = vector.broadcast %cst_93 : f32 to vector<2x32xf32>
    %286 = arith.subf %285, %279 : vector<2x32xf32>
    %287 = arith.mulf %286, %284 : vector<2x32xf32>
    %288 = arith.mulf %279, %246 : vector<2x32xf32>
    %289 = arith.addf %287, %288 : vector<2x32xf32>
    %290 = vector.extract_strided_slice %289 {offsets = [0, 0], sizes = [2, 16], strides = [1, 1]} : vector<2x32xf32> to vector<2x16xf32>
    %291 = arith.index_cast %c3_i32 : i32 to index
    %c0_94 = arith.constant 0 : index
    %c0_95 = arith.constant 0 : index
    %292 = vector.load %arg17[%291, %c0_94, %c0_95] : memref<8x2x32xf32, #tpu.memory_space<vmem>>, vector<1x2x16xf32>
    %293 = vector.shape_cast %292 : vector<1x2x16xf32> to vector<2x16xf32>
    %294 = vector.shape_cast %290 : vector<2x16xf32> to vector<1x2x16xf32>
    tpu.vector_store %arg17[%291, %c0_94, %c0_95], %294 {strides = array<i32>} : memref<8x2x32xf32, #tpu.memory_space<vmem>>, vector<1x2x16xf32>,
    %295 = vector.extract_strided_slice %289 {offsets = [0, 16], sizes = [2, 16], strides = [1, 1]} : vector<2x32xf32> to vector<2x16xf32>
    %c7_i32_96 = arith.constant 7 : i32
    %296 = arith.subi %c7_i32_96, %c3_i32 : i32
    %297 = arith.index_cast %296 : i32 to index
    %c0_97 = arith.constant 0 : index
    %c16_98 = arith.constant 16 : index
    %298 = vector.load %arg17[%297, %c0_97, %c16_98] : memref<8x2x32xf32, #tpu.memory_space<vmem>>, vector<1x2x16xf32>
    %299 = vector.shape_cast %298 : vector<1x2x16xf32> to vector<2x16xf32>
    %300 = vector.shape_cast %295 : vector<2x16xf32> to vector<1x2x16xf32>
    tpu.vector_store %arg17[%297, %c0_97, %c16_98], %300 {strides = array<i32>} : memref<8x2x32xf32, #tpu.memory_space<vmem>>, vector<1x2x16xf32>,
    %c4_i32 = arith.constant 4 : i32
    %301 = arith.index_cast %c4_i32 : i32 to index
    %c0_99 = arith.constant 0 : index
    %c0_100 = arith.constant 0 : index
    %302 = vector.load %arg16[%301, %c0_99, %c0_100] : memref<8x2x96xf32, #tpu.memory_space<vmem>>, vector<1x2x96xf32>
    %303 = vector.shape_cast %302 : vector<1x2x96xf32> to vector<2x96xf32>
    %304 = arith.truncf %289 : vector<2x32xf32> to vector<2x32xbf16>
    %cst_101 = arith.constant dense<0.000000e+00> : vector<2x96xf32>
    %305 = tpu.matmul %304, %124, %cst_101 {dimension_numbers = #tpu.dot_dimension_numbers<[1], [0], [0], [1], [0, 0, 1, 1], [], []>} : vector<2x32xbf16>, vector<32x96xbf16>, vector<2x96xf32> -> vector<2x96xf32>
    %306 = arith.addf %305, %127 : vector<2x96xf32>
    %307 = vector.extract_strided_slice %303 {offsets = [0, 0], sizes = [2, 32], strides = [1, 1]} : vector<2x96xf32> to vector<2x32xf32>
    %308 = vector.extract_strided_slice %306 {offsets = [0, 0], sizes = [2, 32], strides = [1, 1]} : vector<2x96xf32> to vector<2x32xf32>
    %309 = arith.addf %307, %308 : vector<2x32xf32>
    %310 = arith.negf %309 : vector<2x32xf32>
    %311 = math.exp %310 : vector<2x32xf32>
    %cst_102 = arith.constant 1.000000e+00 : f32
    %312 = vector.broadcast %cst_102 : f32 to vector<2x32xf32>
    %313 = arith.addf %312, %311 : vector<2x32xf32>
    %314 = arith.divf %312, %313 : vector<2x32xf32>
    %315 = vector.extract_strided_slice %303 {offsets = [0, 32], sizes = [2, 32], strides = [1, 1]} : vector<2x96xf32> to vector<2x32xf32>
    %316 = vector.extract_strided_slice %306 {offsets = [0, 32], sizes = [2, 32], strides = [1, 1]} : vector<2x96xf32> to vector<2x32xf32>
    %317 = arith.addf %315, %316 : vector<2x32xf32>
    %318 = arith.negf %317 : vector<2x32xf32>
    %319 = math.exp %318 : vector<2x32xf32>
    %cst_103 = arith.constant 1.000000e+00 : f32
    %320 = vector.broadcast %cst_103 : f32 to vector<2x32xf32>
    %321 = arith.addf %320, %319 : vector<2x32xf32>
    %322 = arith.divf %320, %321 : vector<2x32xf32>
    %323 = vector.extract_strided_slice %303 {offsets = [0, 64], sizes = [2, 32], strides = [1, 1]} : vector<2x96xf32> to vector<2x32xf32>
    %324 = vector.extract_strided_slice %306 {offsets = [0, 64], sizes = [2, 32], strides = [1, 1]} : vector<2x96xf32> to vector<2x32xf32>
    %325 = arith.mulf %314, %324 : vector<2x32xf32>
    %326 = arith.addf %323, %325 : vector<2x32xf32>
    %327 = math.tanh %326 : vector<2x32xf32>
    %cst_104 = arith.constant 1.000000e+00 : f32
    %328 = vector.broadcast %cst_104 : f32 to vector<2x32xf32>
    %329 = arith.subf %328, %322 : vector<2x32xf32>
    %330 = arith.mulf %329, %327 : vector<2x32xf32>
    %331 = arith.mulf %322, %289 : vector<2x32xf32>
    %332 = arith.addf %330, %331 : vector<2x32xf32>
    %333 = vector.extract_strided_slice %332 {offsets = [0, 0], sizes = [2, 16], strides = [1, 1]} : vector<2x32xf32> to vector<2x16xf32>
    %334 = arith.index_cast %c4_i32 : i32 to index
    %c0_105 = arith.constant 0 : index
    %c0_106 = arith.constant 0 : index
    %335 = vector.load %arg17[%334, %c0_105, %c0_106] : memref<8x2x32xf32, #tpu.memory_space<vmem>>, vector<1x2x16xf32>
    %336 = vector.shape_cast %335 : vector<1x2x16xf32> to vector<2x16xf32>
    %337 = vector.shape_cast %333 : vector<2x16xf32> to vector<1x2x16xf32>
    tpu.vector_store %arg17[%334, %c0_105, %c0_106], %337 {strides = array<i32>} : memref<8x2x32xf32, #tpu.memory_space<vmem>>, vector<1x2x16xf32>,
    %338 = vector.extract_strided_slice %332 {offsets = [0, 16], sizes = [2, 16], strides = [1, 1]} : vector<2x32xf32> to vector<2x16xf32>
    %c7_i32_107 = arith.constant 7 : i32
    %339 = arith.subi %c7_i32_107, %c4_i32 : i32
    %340 = arith.index_cast %339 : i32 to index
    %c0_108 = arith.constant 0 : index
    %c16_109 = arith.constant 16 : index
    %341 = vector.load %arg17[%340, %c0_108, %c16_109] : memref<8x2x32xf32, #tpu.memory_space<vmem>>, vector<1x2x16xf32>
    %342 = vector.shape_cast %341 : vector<1x2x16xf32> to vector<2x16xf32>
    %343 = vector.shape_cast %338 : vector<2x16xf32> to vector<1x2x16xf32>
    tpu.vector_store %arg17[%340, %c0_108, %c16_109], %343 {strides = array<i32>} : memref<8x2x32xf32, #tpu.memory_space<vmem>>, vector<1x2x16xf32>,
    %c5_i32 = arith.constant 5 : i32
    %344 = arith.index_cast %c5_i32 : i32 to index
    %c0_110 = arith.constant 0 : index
    %c0_111 = arith.constant 0 : index
    %345 = vector.load %arg16[%344, %c0_110, %c0_111] : memref<8x2x96xf32, #tpu.memory_space<vmem>>, vector<1x2x96xf32>
    %346 = vector.shape_cast %345 : vector<1x2x96xf32> to vector<2x96xf32>
    %347 = arith.truncf %332 : vector<2x32xf32> to vector<2x32xbf16>
    %cst_112 = arith.constant dense<0.000000e+00> : vector<2x96xf32>
    %348 = tpu.matmul %347, %124, %cst_112 {dimension_numbers = #tpu.dot_dimension_numbers<[1], [0], [0], [1], [0, 0, 1, 1], [], []>} : vector<2x32xbf16>, vector<32x96xbf16>, vector<2x96xf32> -> vector<2x96xf32>
    %349 = arith.addf %348, %127 : vector<2x96xf32>
    %350 = vector.extract_strided_slice %346 {offsets = [0, 0], sizes = [2, 32], strides = [1, 1]} : vector<2x96xf32> to vector<2x32xf32>
    %351 = vector.extract_strided_slice %349 {offsets = [0, 0], sizes = [2, 32], strides = [1, 1]} : vector<2x96xf32> to vector<2x32xf32>
    %352 = arith.addf %350, %351 : vector<2x32xf32>
    %353 = arith.negf %352 : vector<2x32xf32>
    %354 = math.exp %353 : vector<2x32xf32>
    %cst_113 = arith.constant 1.000000e+00 : f32
    %355 = vector.broadcast %cst_113 : f32 to vector<2x32xf32>
    %356 = arith.addf %355, %354 : vector<2x32xf32>
    %357 = arith.divf %355, %356 : vector<2x32xf32>
    %358 = vector.extract_strided_slice %346 {offsets = [0, 32], sizes = [2, 32], strides = [1, 1]} : vector<2x96xf32> to vector<2x32xf32>
    %359 = vector.extract_strided_slice %349 {offsets = [0, 32], sizes = [2, 32], strides = [1, 1]} : vector<2x96xf32> to vector<2x32xf32>
    %360 = arith.addf %358, %359 : vector<2x32xf32>
    %361 = arith.negf %360 : vector<2x32xf32>
    %362 = math.exp %361 : vector<2x32xf32>
    %cst_114 = arith.constant 1.000000e+00 : f32
    %363 = vector.broadcast %cst_114 : f32 to vector<2x32xf32>
    %364 = arith.addf %363, %362 : vector<2x32xf32>
    %365 = arith.divf %363, %364 : vector<2x32xf32>
    %366 = vector.extract_strided_slice %346 {offsets = [0, 64], sizes = [2, 32], strides = [1, 1]} : vector<2x96xf32> to vector<2x32xf32>
    %367 = vector.extract_strided_slice %349 {offsets = [0, 64], sizes = [2, 32], strides = [1, 1]} : vector<2x96xf32> to vector<2x32xf32>
    %368 = arith.mulf %357, %367 : vector<2x32xf32>
    %369 = arith.addf %366, %368 : vector<2x32xf32>
    %370 = math.tanh %369 : vector<2x32xf32>
    %cst_115 = arith.constant 1.000000e+00 : f32
    %371 = vector.broadcast %cst_115 : f32 to vector<2x32xf32>
    %372 = arith.subf %371, %365 : vector<2x32xf32>
    %373 = arith.mulf %372, %370 : vector<2x32xf32>
    %374 = arith.mulf %365, %332 : vector<2x32xf32>
    %375 = arith.addf %373, %374 : vector<2x32xf32>
    %376 = vector.extract_strided_slice %375 {offsets = [0, 0], sizes = [2, 16], strides = [1, 1]} : vector<2x32xf32> to vector<2x16xf32>
    %377 = arith.index_cast %c5_i32 : i32 to index
    %c0_116 = arith.constant 0 : index
    %c0_117 = arith.constant 0 : index
    %378 = vector.load %arg17[%377, %c0_116, %c0_117] : memref<8x2x32xf32, #tpu.memory_space<vmem>>, vector<1x2x16xf32>
    %379 = vector.shape_cast %378 : vector<1x2x16xf32> to vector<2x16xf32>
    %380 = vector.shape_cast %376 : vector<2x16xf32> to vector<1x2x16xf32>
    tpu.vector_store %arg17[%377, %c0_116, %c0_117], %380 {strides = array<i32>} : memref<8x2x32xf32, #tpu.memory_space<vmem>>, vector<1x2x16xf32>,
    %381 = vector.extract_strided_slice %375 {offsets = [0, 16], sizes = [2, 16], strides = [1, 1]} : vector<2x32xf32> to vector<2x16xf32>
    %c7_i32_118 = arith.constant 7 : i32
    %382 = arith.subi %c7_i32_118, %c5_i32 : i32
    %383 = arith.index_cast %382 : i32 to index
    %c0_119 = arith.constant 0 : index
    %c16_120 = arith.constant 16 : index
    %384 = vector.load %arg17[%383, %c0_119, %c16_120] : memref<8x2x32xf32, #tpu.memory_space<vmem>>, vector<1x2x16xf32>
    %385 = vector.shape_cast %384 : vector<1x2x16xf32> to vector<2x16xf32>
    %386 = vector.shape_cast %381 : vector<2x16xf32> to vector<1x2x16xf32>
    tpu.vector_store %arg17[%383, %c0_119, %c16_120], %386 {strides = array<i32>} : memref<8x2x32xf32, #tpu.memory_space<vmem>>, vector<1x2x16xf32>,
    %c6_i32 = arith.constant 6 : i32
    %387 = arith.index_cast %c6_i32 : i32 to index
    %c0_121 = arith.constant 0 : index
    %c0_122 = arith.constant 0 : index
    %388 = vector.load %arg16[%387, %c0_121, %c0_122] : memref<8x2x96xf32, #tpu.memory_space<vmem>>, vector<1x2x96xf32>
    %389 = vector.shape_cast %388 : vector<1x2x96xf32> to vector<2x96xf32>
    %390 = arith.truncf %375 : vector<2x32xf32> to vector<2x32xbf16>
    %cst_123 = arith.constant dense<0.000000e+00> : vector<2x96xf32>
    %391 = tpu.matmul %390, %124, %cst_123 {dimension_numbers = #tpu.dot_dimension_numbers<[1], [0], [0], [1], [0, 0, 1, 1], [], []>} : vector<2x32xbf16>, vector<32x96xbf16>, vector<2x96xf32> -> vector<2x96xf32>
    %392 = arith.addf %391, %127 : vector<2x96xf32>
    %393 = vector.extract_strided_slice %389 {offsets = [0, 0], sizes = [2, 32], strides = [1, 1]} : vector<2x96xf32> to vector<2x32xf32>
    %394 = vector.extract_strided_slice %392 {offsets = [0, 0], sizes = [2, 32], strides = [1, 1]} : vector<2x96xf32> to vector<2x32xf32>
    %395 = arith.addf %393, %394 : vector<2x32xf32>
    %396 = arith.negf %395 : vector<2x32xf32>
    %397 = math.exp %396 : vector<2x32xf32>
    %cst_124 = arith.constant 1.000000e+00 : f32
    %398 = vector.broadcast %cst_124 : f32 to vector<2x32xf32>
    %399 = arith.addf %398, %397 : vector<2x32xf32>
    %400 = arith.divf %398, %399 : vector<2x32xf32>
    %401 = vector.extract_strided_slice %389 {offsets = [0, 32], sizes = [2, 32], strides = [1, 1]} : vector<2x96xf32> to vector<2x32xf32>
    %402 = vector.extract_strided_slice %392 {offsets = [0, 32], sizes = [2, 32], strides = [1, 1]} : vector<2x96xf32> to vector<2x32xf32>
    %403 = arith.addf %401, %402 : vector<2x32xf32>
    %404 = arith.negf %403 : vector<2x32xf32>
    %405 = math.exp %404 : vector<2x32xf32>
    %cst_125 = arith.constant 1.000000e+00 : f32
    %406 = vector.broadcast %cst_125 : f32 to vector<2x32xf32>
    %407 = arith.addf %406, %405 : vector<2x32xf32>
    %408 = arith.divf %406, %407 : vector<2x32xf32>
    %409 = vector.extract_strided_slice %389 {offsets = [0, 64], sizes = [2, 32], strides = [1, 1]} : vector<2x96xf32> to vector<2x32xf32>
    %410 = vector.extract_strided_slice %392 {offsets = [0, 64], sizes = [2, 32], strides = [1, 1]} : vector<2x96xf32> to vector<2x32xf32>
    %411 = arith.mulf %400, %410 : vector<2x32xf32>
    %412 = arith.addf %409, %411 : vector<2x32xf32>
    %413 = math.tanh %412 : vector<2x32xf32>
    %cst_126 = arith.constant 1.000000e+00 : f32
    %414 = vector.broadcast %cst_126 : f32 to vector<2x32xf32>
    %415 = arith.subf %414, %408 : vector<2x32xf32>
    %416 = arith.mulf %415, %413 : vector<2x32xf32>
    %417 = arith.mulf %408, %375 : vector<2x32xf32>
    %418 = arith.addf %416, %417 : vector<2x32xf32>
    %419 = vector.extract_strided_slice %418 {offsets = [0, 0], sizes = [2, 16], strides = [1, 1]} : vector<2x32xf32> to vector<2x16xf32>
    %420 = arith.index_cast %c6_i32 : i32 to index
    %c0_127 = arith.constant 0 : index
    %c0_128 = arith.constant 0 : index
    %421 = vector.load %arg17[%420, %c0_127, %c0_128] : memref<8x2x32xf32, #tpu.memory_space<vmem>>, vector<1x2x16xf32>
    %422 = vector.shape_cast %421 : vector<1x2x16xf32> to vector<2x16xf32>
    %423 = vector.shape_cast %419 : vector<2x16xf32> to vector<1x2x16xf32>
    tpu.vector_store %arg17[%420, %c0_127, %c0_128], %423 {strides = array<i32>} : memref<8x2x32xf32, #tpu.memory_space<vmem>>, vector<1x2x16xf32>,
    %424 = vector.extract_strided_slice %418 {offsets = [0, 16], sizes = [2, 16], strides = [1, 1]} : vector<2x32xf32> to vector<2x16xf32>
    %c7_i32_129 = arith.constant 7 : i32
    %425 = arith.subi %c7_i32_129, %c6_i32 : i32
    %426 = arith.index_cast %425 : i32 to index
    %c0_130 = arith.constant 0 : index
    %c16_131 = arith.constant 16 : index
    %427 = vector.load %arg17[%426, %c0_130, %c16_131] : memref<8x2x32xf32, #tpu.memory_space<vmem>>, vector<1x2x16xf32>
    %428 = vector.shape_cast %427 : vector<1x2x16xf32> to vector<2x16xf32>
    %429 = vector.shape_cast %424 : vector<2x16xf32> to vector<1x2x16xf32>
    tpu.vector_store %arg17[%426, %c0_130, %c16_131], %429 {strides = array<i32>} : memref<8x2x32xf32, #tpu.memory_space<vmem>>, vector<1x2x16xf32>,
    %c7_i32_132 = arith.constant 7 : i32
    %430 = arith.index_cast %c7_i32_132 : i32 to index
    %c0_133 = arith.constant 0 : index
    %c0_134 = arith.constant 0 : index
    %431 = vector.load %arg16[%430, %c0_133, %c0_134] : memref<8x2x96xf32, #tpu.memory_space<vmem>>, vector<1x2x96xf32>
    %432 = vector.shape_cast %431 : vector<1x2x96xf32> to vector<2x96xf32>
    %433 = arith.truncf %418 : vector<2x32xf32> to vector<2x32xbf16>
    %cst_135 = arith.constant dense<0.000000e+00> : vector<2x96xf32>
    %434 = tpu.matmul %433, %124, %cst_135 {dimension_numbers = #tpu.dot_dimension_numbers<[1], [0], [0], [1], [0, 0, 1, 1], [], []>} : vector<2x32xbf16>, vector<32x96xbf16>, vector<2x96xf32> -> vector<2x96xf32>
    %435 = arith.addf %434, %127 : vector<2x96xf32>
    %436 = vector.extract_strided_slice %432 {offsets = [0, 0], sizes = [2, 32], strides = [1, 1]} : vector<2x96xf32> to vector<2x32xf32>
    %437 = vector.extract_strided_slice %435 {offsets = [0, 0], sizes = [2, 32], strides = [1, 1]} : vector<2x96xf32> to vector<2x32xf32>
    %438 = arith.addf %436, %437 : vector<2x32xf32>
    %439 = arith.negf %438 : vector<2x32xf32>
    %440 = math.exp %439 : vector<2x32xf32>
    %cst_136 = arith.constant 1.000000e+00 : f32
    %441 = vector.broadcast %cst_136 : f32 to vector<2x32xf32>
    %442 = arith.addf %441, %440 : vector<2x32xf32>
    %443 = arith.divf %441, %442 : vector<2x32xf32>
    %444 = vector.extract_strided_slice %432 {offsets = [0, 32], sizes = [2, 32], strides = [1, 1]} : vector<2x96xf32> to vector<2x32xf32>
    %445 = vector.extract_strided_slice %435 {offsets = [0, 32], sizes = [2, 32], strides = [1, 1]} : vector<2x96xf32> to vector<2x32xf32>
    %446 = arith.addf %444, %445 : vector<2x32xf32>
    %447 = arith.negf %446 : vector<2x32xf32>
    %448 = math.exp %447 : vector<2x32xf32>
    %cst_137 = arith.constant 1.000000e+00 : f32
    %449 = vector.broadcast %cst_137 : f32 to vector<2x32xf32>
    %450 = arith.addf %449, %448 : vector<2x32xf32>
    %451 = arith.divf %449, %450 : vector<2x32xf32>
    %452 = vector.extract_strided_slice %432 {offsets = [0, 64], sizes = [2, 32], strides = [1, 1]} : vector<2x96xf32> to vector<2x32xf32>
    %453 = vector.extract_strided_slice %435 {offsets = [0, 64], sizes = [2, 32], strides = [1, 1]} : vector<2x96xf32> to vector<2x32xf32>
    %454 = arith.mulf %443, %453 : vector<2x32xf32>
    %455 = arith.addf %452, %454 : vector<2x32xf32>
    %456 = math.tanh %455 : vector<2x32xf32>
    %cst_138 = arith.constant 1.000000e+00 : f32
    %457 = vector.broadcast %cst_138 : f32 to vector<2x32xf32>
    %458 = arith.subf %457, %451 : vector<2x32xf32>
    %459 = arith.mulf %458, %456 : vector<2x32xf32>
    %460 = arith.mulf %451, %418 : vector<2x32xf32>
    %461 = arith.addf %459, %460 : vector<2x32xf32>
    %462 = vector.extract_strided_slice %461 {offsets = [0, 0], sizes = [2, 16], strides = [1, 1]} : vector<2x32xf32> to vector<2x16xf32>
    %463 = arith.index_cast %c7_i32_132 : i32 to index
    %c0_139 = arith.constant 0 : index
    %c0_140 = arith.constant 0 : index
    %464 = vector.load %arg17[%463, %c0_139, %c0_140] : memref<8x2x32xf32, #tpu.memory_space<vmem>>, vector<1x2x16xf32>
    %465 = vector.shape_cast %464 : vector<1x2x16xf32> to vector<2x16xf32>
    %466 = vector.shape_cast %462 : vector<2x16xf32> to vector<1x2x16xf32>
    tpu.vector_store %arg17[%463, %c0_139, %c0_140], %466 {strides = array<i32>} : memref<8x2x32xf32, #tpu.memory_space<vmem>>, vector<1x2x16xf32>,
    %467 = vector.extract_strided_slice %461 {offsets = [0, 16], sizes = [2, 16], strides = [1, 1]} : vector<2x32xf32> to vector<2x16xf32>
    %c7_i32_141 = arith.constant 7 : i32
    %468 = arith.subi %c7_i32_141, %c7_i32_132 : i32
    %469 = arith.index_cast %468 : i32 to index
    %c0_142 = arith.constant 0 : index
    %c16_143 = arith.constant 16 : index
    %470 = vector.load %arg17[%469, %c0_142, %c16_143] : memref<8x2x32xf32, #tpu.memory_space<vmem>>, vector<1x2x16xf32>
    %471 = vector.shape_cast %470 : vector<1x2x16xf32> to vector<2x16xf32>
    %472 = vector.shape_cast %467 : vector<2x16xf32> to vector<1x2x16xf32>
    tpu.vector_store %arg17[%469, %c0_142, %c16_143], %472 {strides = array<i32>} : memref<8x2x32xf32, #tpu.memory_space<vmem>>, vector<1x2x16xf32>,
    %c8_i32 = arith.constant 8 : i32
    %c0_144 = arith.constant 0 : index
    %c0_145 = arith.constant 0 : index
    %c0_146 = arith.constant 0 : index
    %473 = vector.load %arg17[%c0_144, %c0_145, %c0_146] : memref<8x2x32xf32, #tpu.memory_space<vmem>>, vector<8x1x32xf32>
    %474 = vector.shape_cast %473 : vector<8x1x32xf32> to vector<8x32xf32>
    %c0_147 = arith.constant 0 : index
    %c0_148 = arith.constant 0 : index
    %475 = vector.load %arg19[%c0_147, %c0_148] : memref<16x32xf32, #tpu.memory_space<vmem>>, vector<8x32xf32>
    tpu.vector_store %arg19[%c0_147, %c0_148], %474 {strides = array<i32>} : memref<16x32xf32, #tpu.memory_space<vmem>>, vector<8x32xf32>,
    %c0_149 = arith.constant 0 : index
    %c1_150 = arith.constant 1 : index
    %c0_151 = arith.constant 0 : index
    %476 = vector.load %arg17[%c0_149, %c1_150, %c0_151] : memref<8x2x32xf32, #tpu.memory_space<vmem>>, vector<8x1x32xf32>
    %477 = vector.shape_cast %476 : vector<8x1x32xf32> to vector<8x32xf32>
    %c8 = arith.constant 8 : index
    %c0_152 = arith.constant 0 : index
    %478 = vector.load %arg19[%c8, %c0_152] : memref<16x32xf32, #tpu.memory_space<vmem>>, vector<8x32xf32>
    tpu.vector_store %arg19[%c8, %c0_152], %477 {strides = array<i32>} : memref<16x32xf32, #tpu.memory_space<vmem>>, vector<8x32xf32>,
    %c0_153 = arith.constant 0 : index
    %c0_154 = arith.constant 0 : index
    %479 = vector.load %arg19[%c0_153, %c0_154] : memref<16x32xf32, #tpu.memory_space<vmem>>, vector<16x32xf32>
    %480 = arith.truncf %479 : vector<16x32xf32> to vector<16x32xbf16>
    %c0_155 = arith.constant 0 : index
    %c0_156 = arith.constant 0 : index
    %481 = vector.load %arg9[%c0_155, %c0_156] : memref<32x96xbf16, #tpu.memory_space<vmem>>, vector<32x96xbf16>
    %cst_157 = arith.constant dense<0.000000e+00> : vector<16x96xf32>
    %482 = tpu.matmul %480, %481, %cst_157 {dimension_numbers = #tpu.dot_dimension_numbers<[1], [0], [0], [1], [0, 0, 1, 1], [], []>} : vector<16x32xbf16>, vector<32x96xbf16>, vector<16x96xf32> -> vector<16x96xf32>
    %c0_158 = arith.constant 0 : index
    %c0_159 = arith.constant 0 : index
    %483 = vector.load %arg10[%c0_158, %c0_159] : memref<1x96xf32, #tpu.memory_space<vmem>>, vector<1x96xf32>
    %484 = vector.broadcast %483 : vector<1x96xf32> to vector<16x96xf32>
    %485 = arith.addf %482, %484 : vector<16x96xf32>
    %cst_160 = arith.constant 0.000000e+00 : f32
    %486 = vector.broadcast %cst_160 : f32 to vector<16x96xf32>
    %487 = arith.maximumf %485, %486 : vector<16x96xf32>
    %488 = vector.extract_strided_slice %487 {offsets = [0, 0], sizes = [8, 96], strides = [1, 1]} : vector<16x96xf32> to vector<8x96xf32>
    %c0_161 = arith.constant 0 : index
    %c0_162 = arith.constant 0 : index
    %c0_163 = arith.constant 0 : index
    %489 = vector.load %arg20[%c0_161, %c0_162, %c0_163] : memref<2x8x96xf32, #tpu.memory_space<vmem>>, vector<1x8x96xf32>
    %490 = vector.shape_cast %489 : vector<1x8x96xf32> to vector<8x96xf32>
    %491 = vector.shape_cast %488 : vector<8x96xf32> to vector<1x8x96xf32>
    tpu.vector_store %arg20[%c0_161, %c0_162, %c0_163], %491 {strides = array<i32>} : memref<2x8x96xf32, #tpu.memory_space<vmem>>, vector<1x8x96xf32>,
    %492 = vector.extract_strided_slice %487 {offsets = [8, 0], sizes = [8, 96], strides = [1, 1]} : vector<16x96xf32> to vector<8x96xf32>
    %c1_164 = arith.constant 1 : index
    %c0_165 = arith.constant 0 : index
    %c0_166 = arith.constant 0 : index
    %493 = vector.load %arg20[%c1_164, %c0_165, %c0_166] : memref<2x8x96xf32, #tpu.memory_space<vmem>>, vector<1x8x96xf32>
    %494 = vector.shape_cast %493 : vector<1x8x96xf32> to vector<8x96xf32>
    %495 = vector.shape_cast %492 : vector<8x96xf32> to vector<1x8x96xf32>
    tpu.vector_store %arg20[%c1_164, %c0_165, %c0_166], %495 {strides = array<i32>} : memref<2x8x96xf32, #tpu.memory_space<vmem>>, vector<1x8x96xf32>,
    %c0_167 = arith.constant 0 : index
    %c0_168 = arith.constant 0 : index
    %c0_169 = arith.constant 0 : index
    %496 = vector.load %arg18[%c0_167, %c0_168, %c0_169] : memref<2x8x96xf32, #tpu.memory_space<vmem>>, vector<2x8x96xf32>
    %c0_170 = arith.constant 0 : index
    %c0_171 = arith.constant 0 : index
    %c0_172 = arith.constant 0 : index
    %497 = vector.load %arg20[%c0_170, %c0_171, %c0_172] : memref<2x8x96xf32, #tpu.memory_space<vmem>>, vector<2x8x96xf32>
    %498 = arith.truncf %497 : vector<2x8x96xf32> to vector<2x8x96xbf16>
    %c0_173 = arith.constant 0 : index
    %c0_174 = arith.constant 0 : index
    %c0_175 = arith.constant 0 : index
    %499 = vector.load %arg2[%c0_173, %c0_174, %c0_175] : memref<2x8x1xf32, #tpu.memory_space<vmem>>, vector<2x8x1xf32>
    %c0_176 = arith.constant 0 : index
    %c0_177 = arith.constant 0 : index
    %500 = vector.load %arg12[%c0_176, %c0_177] : memref<1x1xf32, #tpu.memory_space<vmem>>, vector<1x1xf32>
    %c0_178 = arith.constant 0 : index
    %c0_179 = arith.constant 0 : index
    %501 = vector.load %arg11[%c0_178, %c0_179] : memref<1x96xf32, #tpu.memory_space<vmem>>, vector<1x96xf32>
    %502 = vector.shape_cast %501 : vector<1x96xf32> to vector<1x1x96xf32>
    %503 = vector.broadcast %502 : vector<1x1x96xf32> to vector<2x8x96xf32>
    %504 = arith.mulf %496, %503 : vector<2x8x96xf32>
    %505 = arith.truncf %504 : vector<2x8x96xf32> to vector<2x8x96xbf16>
    "tpu.trace_start"() <{level = 10 : i32, message = "bvk,bqk->bvq"}> : () -> ()
    %cst_180 = arith.constant dense<0.000000e+00> : vector<2x8x8xf32>
    %506 = tpu.matmul %505, %498, %cst_180 {dimension_numbers = #tpu.dot_dimension_numbers<[2], [2], [1], [1], [0, 0, 0, 1, 1, 1], [0], [0]>} : vector<2x8x96xbf16>, vector<2x8x96xbf16>, vector<2x8x8xf32> -> vector<2x8x8xf32>
    "tpu.trace_stop"() : () -> ()
    %507 = vector.shape_cast %500 : vector<1x1xf32> to vector<1x1x1xf32>
    %508 = vector.broadcast %507 : vector<1x1x1xf32> to vector<2x8x8xf32>
    %509 = arith.addf %506, %508 : vector<2x8x8xf32>
    %510 = vector.broadcast %499 : vector<2x8x1xf32> to vector<2x8x8xf32>
    %511 = arith.mulf %509, %510 : vector<2x8x8xf32>
    %512 = arith.truncf %511 : vector<2x8x8xf32> to vector<2x8x8xbf16>
    "tpu.trace_start"() <{level = 10 : i32, message = "bvq,bqk->bvk"}> : () -> ()
    %cst_181 = arith.constant dense<0.000000e+00> : vector<2x8x96xf32>
    %513 = tpu.matmul %512, %498, %cst_181 {dimension_numbers = #tpu.dot_dimension_numbers<[2], [1], [1], [2], [0, 0, 0, 1, 1, 2], [0], [0]>} : vector<2x8x8xbf16>, vector<2x8x96xbf16>, vector<2x8x96xf32> -> vector<2x8x96xf32>
    "tpu.trace_stop"() : () -> ()
    %514 = arith.mulf %496, %513 : vector<2x8x96xf32>
    %cst_182 = arith.constant dense<0.000000e+00> : vector<2x96xf32>
    %515 = vector.multi_reduction <add>, %514, %cst_182 [1] : vector<2x8x96xf32> to vector<2x96xf32>
    %c0_183 = arith.constant 0 : index
    %c0_184 = arith.constant 0 : index
    %516 = vector.load %arg13[%c0_183, %c0_184] : memref<1x96xf32, #tpu.memory_space<vmem>>, vector<1x96xf32>
    %517 = vector.broadcast %516 : vector<1x96xf32> to vector<2x96xf32>
    %518 = arith.mulf %515, %517 : vector<2x96xf32>
    %cst_185 = arith.constant dense<0.000000e+00> : vector<2xf32>
    %519 = vector.multi_reduction <add>, %518, %cst_185 [1] : vector<2x96xf32> to vector<2xf32>
    %520 = vector.shape_cast %519 : vector<2xf32> to vector<2x1xf32>
    %c0_186 = arith.constant 0 : index
    %c0_187 = arith.constant 0 : index
    %521 = vector.load %arg14[%c0_186, %c0_187] : memref<1x1xf32, #tpu.memory_space<vmem>>, vector<1x1xf32>
    %522 = vector.broadcast %521 : vector<1x1xf32> to vector<2x1xf32>
    %523 = arith.addf %520, %522 : vector<2x1xf32>
    %524 = tpu.iota {dimensions = array<i32: 0>} : vector<8x8xi32>
    %525 = tpu.iota {dimensions = array<i32: 1>} : vector<8x8xi32>
    %526 = arith.cmpi eq, %524, %525 : vector<8x8xi32>
    %527 = arith.extui %526 : vector<8x8xi1> to vector<8x8xi32>
    %528 = arith.sitofp %527 : vector<8x8xi32> to vector<8x8xf32>
    %529 = vector.shape_cast %528 : vector<8x8xf32> to vector<1x8x8xf32>
    %530 = vector.broadcast %529 : vector<1x8x8xf32> to vector<2x8x8xf32>
    %531 = arith.mulf %511, %530 : vector<2x8x8xf32>
    %cst_188 = arith.constant dense<0.000000e+00> : vector<2x8xf32>
    %532 = vector.multi_reduction <add>, %531, %cst_188 [1] : vector<2x8x8xf32> to vector<2x8xf32>
    %cst_189 = arith.constant 0.000000e+00 : f32
    %533 = vector.broadcast %cst_189 : f32 to vector<2x119xf32>
    %534 = tpu.concatenate %523, %532, %533 in 1 : vector<2x1xf32>, vector<2x8xf32>, vector<2x119xf32> -> vector<2x128xf32>
    %c0_190 = arith.constant 0 : index
    %c0_191 = arith.constant 0 : index
    %535 = vector.load %arg15[%c0_190, %c0_191] : memref<2x128xf32, #tpu.memory_space<vmem>>, vector<2x128xf32>
    tpu.vector_store %arg15[%c0_190, %c0_191], %534 {strides = array<i32>} : memref<2x128xf32, #tpu.memory_space<vmem>>, vector<2x128xf32>,
    return
  }
  func.func @transform_0(%arg0: i32) -> (i32, i32) {
    %c0_i32 = arith.constant 0 : i32
    %c0_i32_0 = arith.constant 0 : i32
    %c0_i32_1 = arith.constant 0 : i32
    return %c0_i32, %c0_i32_0 : i32, i32
  }
  func.func @transform_1(%arg0: i32) -> (i32, i32, i32) {
    %c0_i32 = arith.constant 0 : i32
    %c0_i32_0 = arith.constant 0 : i32
    %c0_i32_1 = arith.constant 0 : i32
    %c0_i32_2 = arith.constant 0 : i32
    return %c0_i32, %c0_i32_0, %c0_i32_1 : i32, i32, i32
  }
  func.func @transform_2(%arg0: i32) -> (i32, i32) {
    %c0_i32 = arith.constant 0 : i32
    %c0_i32_0 = arith.constant 0 : i32
    %c0_i32_1 = arith.constant 0 : i32
    return %c0_i32, %c0_i32_0 : i32, i32
  }
  func.func @transform_3(%arg0: i32) -> (i32, i32) {
    %c0_i32 = arith.constant 0 : i32
    %c0_i32_0 = arith.constant 0 : i32
    %c0_i32_1 = arith.constant 0 : i32
    return %c0_i32, %c0_i32_0 : i32, i32
  }
  func.func @transform_4(%arg0: i32) -> (i32, i32) {
    %c0_i32 = arith.constant 0 : i32
    %c0_i32_0 = arith.constant 0 : i32
    %c0_i32_1 = arith.constant 0 : i32
    return %c0_i32, %c0_i32_0 : i32, i32
  }
  func.func @transform_5(%arg0: i32) -> (i32, i32) {
    %c0_i32 = arith.constant 0 : i32
    %c0_i32_0 = arith.constant 0 : i32
    %c0_i32_1 = arith.constant 0 : i32
    return %c0_i32, %c0_i32_0 : i32, i32
  }
  func.func @transform_6(%arg0: i32) -> (i32, i32) {
    %c0_i32 = arith.constant 0 : i32
    %c0_i32_0 = arith.constant 0 : i32
    %c0_i32_1 = arith.constant 0 : i32
    return %c0_i32, %c0_i32_0 : i32, i32
  }
  func.func @transform_7(%arg0: i32) -> (i32, i32) {
    %c0_i32 = arith.constant 0 : i32
    %c0_i32_0 = arith.constant 0 : i32
    %c0_i32_1 = arith.constant 0 : i32
    return %c0_i32, %c0_i32_0 : i32, i32
  }
  func.func @transform_8(%arg0: i32) -> (i32, i32) {
    %c0_i32 = arith.constant 0 : i32
    %c0_i32_0 = arith.constant 0 : i32
    %c0_i32_1 = arith.constant 0 : i32
    return %c0_i32, %c0_i32_0 : i32, i32
  }
  func.func @transform_9(%arg0: i32) -> (i32, i32) {
    %c0_i32 = arith.constant 0 : i32
    %c0_i32_0 = arith.constant 0 : i32
    %c0_i32_1 = arith.constant 0 : i32
    return %c0_i32, %c0_i32_0 : i32, i32
  }
  func.func @transform_10(%arg0: i32) -> (i32, i32) {
    %c0_i32 = arith.constant 0 : i32
    %c0_i32_0 = arith.constant 0 : i32
    %c0_i32_1 = arith.constant 0 : i32
    return %c0_i32, %c0_i32_0 : i32, i32
  }
  func.func @transform_11(%arg0: i32) -> (i32, i32) {
    %c0_i32 = arith.constant 0 : i32
    %c0_i32_0 = arith.constant 0 : i32
    %c0_i32_1 = arith.constant 0 : i32
    return %c0_i32, %c0_i32_0 : i32, i32
  }
  func.func @transform_12(%arg0: i32) -> (i32, i32) {
    %c0_i32 = arith.constant 0 : i32
    %c0_i32_0 = arith.constant 0 : i32
    %c0_i32_1 = arith.constant 0 : i32
    return %c0_i32, %c0_i32_0 : i32, i32
  }
  func.func @transform_13(%arg0: i32) -> (i32, i32) {
    %c0_i32 = arith.constant 0 : i32
    %c0_i32_0 = arith.constant 0 : i32
    %c0_i32_1 = arith.constant 0 : i32
    return %c0_i32, %c0_i32_0 : i32, i32
  }
  func.func @transform_14(%arg0: i32) -> (i32, i32) {
    %c0_i32 = arith.constant 0 : i32
    %c0_i32_0 = arith.constant 0 : i32
    %c0_i32_1 = arith.constant 0 : i32
    return %c0_i32, %c0_i32_0 : i32, i32
  }
}

</mosaic_0001>

<llo_original>
// kernel: barlinedp_forward.1
$region0: #{barlinedp_forward.1}
  #allocation0 [shape = 'u32[]', space=smem, size = 0x4, offset = 0x4, fixed_abs, tag = 'smem constant byte address 0x4 - core index']
  #allocation1 [shape = 'u32[72,128]{1,0:T(1,128)}', space=vmem, size = 0x9000, scoped, tag = 'internal scratch']
  #allocation2 [shape = 'f32[8,2,96]{2,1,0:T(2,128)}', space=vmem, size = 0x2000, scoped, tag = 'scratch operand']
  #allocation3 [shape = 'f32[8,2,32]{2,1,0:T(2,128)}', space=vmem, size = 0x2000, scoped, tag = 'scratch operand']
  #allocation4 [shape = 'f32[2,8,96]{2,1,0:T(8,128)}', space=vmem, size = 0x2000, scoped, tag = 'scratch operand']
  #allocation5 [shape = 'f32[16,32]{1,0:T(8,128)}', space=vmem, size = 0x2000, scoped, tag = 'scratch operand']
  #allocation6 [shape = 'f32[2,8,96]{2,1,0:T(8,128)}', space=vmem, size = 0x2000, scoped, tag = 'scratch operand']
  #allocation7 [shape = 'f32[1,1]{1,0:T(1,128)S(1)}', space=vmem, size = 0x200, scoped, tag = 'scoped memory for barlinedp_forward.1']
  #allocation8 [shape = 'f32[1,1]{1,0:T(1,128)S(1)}', space=vmem, size = 0x200, scoped, tag = 'scoped memory for barlinedp_forward.1']
  %s0 = inlined_call_operand.vmem [shape: bf16[16,24], index: 0, kind: input, shape index: {}]
  %s1 = inlined_call_operand.vmem [shape: f32[2,8,1], index: 1, kind: input, shape index: {}]
  %s2 = inlined_call_operand.vmem [shape: bf16[24,96], index: 2, kind: input, shape index: {}]
  %s3 = inlined_call_operand.vmem [shape: f32[1,96], index: 3, kind: input, shape index: {}]
  %s4 = inlined_call_operand.vmem [shape: bf16[32,96], index: 4, kind: input, shape index: {}]
  %s5 = inlined_call_operand.vmem [shape: f32[1,96], index: 5, kind: input, shape index: {}]
  %s6 = inlined_call_operand.vmem [shape: bf16[24,96], index: 6, kind: input, shape index: {}]
  %s7 = inlined_call_operand.vmem [shape: f32[1,96], index: 7, kind: input, shape index: {}]
  %s8 = inlined_call_operand.vmem [shape: bf16[32,96], index: 8, kind: input, shape index: {}]
  %s9 = inlined_call_operand.vmem [shape: f32[1,96], index: 9, kind: input, shape index: {}]
  %s10 = inlined_call_operand.vmem [shape: f32[1,96], index: 10, kind: input, shape index: {}]
  %s11 = inlined_call_operand.<no memory space> [shape: f32[1,1], index: 11, kind: input, shape index: {}]
  %s12 = inlined_call_operand.vmem [shape: f32[1,96], index: 12, kind: input, shape index: {}]
  %s13 = inlined_call_operand.<no memory space> [shape: f32[1,1], index: 13, kind: input, shape index: {}]
  %s14 = inlined_call_operand.vmem [shape: f32[2,128], index: 14, kind: output, shape index: {}]
  %s15 = sld [smem:[#allocation0]]
  $region66: #{barlinedp_forward.1} parent=0
    _
  %s17 = ssub.s32 1, %s15
  %s18 = scalar_select 0, %s17, %s15
  %v19 = vstv %s11
  %20 = vst [vmem:[#allocation7] sm:$0x1] %v19
  %v21 = vstv %s13
  %22 = vst [vmem:[#allocation8] sm:$0x1] %v21
  // Predicated region
  $region2: #{barlinedp_forward.1} parent=0 // pred_check
    _
  $region3: #{barlinedp_forward.1} parent=0 // pred_check_branch
    %24 = sbr.rel (0) target = $region5
  $region4: #{barlinedp_forward.1} parent=0 // pred_region
    _
  $region5: #{barlinedp_forward.1} parent=0 // pred_fallthru
    _
  // Predicated region
  $region6: #{barlinedp_forward.1} parent=0 // pred_check
    _
  $region7: #{barlinedp_forward.1} parent=0 // pred_check_branch
    %26 = sbr.rel (0) target = $region9
  $region8: #{barlinedp_forward.1} parent=0 // pred_region
    _
  $region9: #{barlinedp_forward.1} parent=0 // pred_fallthru
    _
  // Predicated region
  $region10: #{barlinedp_forward.1} parent=0 // pred_check
    _
  $region11: #{barlinedp_forward.1} parent=0 // pred_check_branch
    %28 = sbr.rel (0) target = $region13
  $region12: #{barlinedp_forward.1} parent=0 // pred_region
    _
  $region13: #{barlinedp_forward.1} parent=0 // pred_fallthru
    _
  // Predicated region
  $region14: #{barlinedp_forward.1} parent=0 // pred_check
    _
  $region15: #{barlinedp_forward.1} parent=0 // pred_check_branch
    %30 = sbr.rel (0) target = $region17
  $region16: #{barlinedp_forward.1} parent=0 // pred_region
    _
  $region17: #{barlinedp_forward.1} parent=0 // pred_fallthru
    _
  // Predicated region
  $region18: #{barlinedp_forward.1} parent=0 // pred_check
    _
  $region19: #{barlinedp_forward.1} parent=0 // pred_check_branch
    %32 = sbr.rel (0) target = $region21
  $region20: #{barlinedp_forward.1} parent=0 // pred_region
    _
  $region21: #{barlinedp_forward.1} parent=0 // pred_fallthru
    _
  // Predicated region
  $region22: #{barlinedp_forward.1} parent=0 // pred_check
    _
  $region23: #{barlinedp_forward.1} parent=0 // pred_check_branch
    %34 = sbr.rel (0) target = $region25
  $region24: #{barlinedp_forward.1} parent=0 // pred_region
    _
  $region25: #{barlinedp_forward.1} parent=0 // pred_fallthru
    _
  // Predicated region
  $region26: #{barlinedp_forward.1} parent=0 // pred_check
    _
  $region27: #{barlinedp_forward.1} parent=0 // pred_check_branch
    %36 = sbr.rel (0) target = $region29
  $region28: #{barlinedp_forward.1} parent=0 // pred_region
    _
  $region29: #{barlinedp_forward.1} parent=0 // pred_fallthru
    _
  // Predicated region
  $region30: #{barlinedp_forward.1} parent=0 // pred_check
    _
  $region31: #{barlinedp_forward.1} parent=0 // pred_check_branch
    %38 = sbr.rel (0) target = $region33
  $region32: #{barlinedp_forward.1} parent=0 // pred_region
    _
  $region33: #{barlinedp_forward.1} parent=0 // pred_fallthru
    _
  // Predicated region
  $region34: #{barlinedp_forward.1} parent=0 // pred_check
    _
  $region35: #{barlinedp_forward.1} parent=0 // pred_check_branch
    %40 = sbr.rel (0) target = $region37
  $region36: #{barlinedp_forward.1} parent=0 // pred_region
    _
  $region37: #{barlinedp_forward.1} parent=0 // pred_fallthru
    _
  // Predicated region
  $region38: #{barlinedp_forward.1} parent=0 // pred_check
    _
  $region39: #{barlinedp_forward.1} parent=0 // pred_check_branch
    %42 = sbr.rel (0) target = $region41
  $region40: #{barlinedp_forward.1} parent=0 // pred_region
    _
  $region41: #{barlinedp_forward.1} parent=0 // pred_fallthru
    _
  // Predicated region
  $region42: #{barlinedp_forward.1} parent=0 // pred_check
    _
  $region43: #{barlinedp_forward.1} parent=0 // pred_check_branch
    %44 = sbr.rel (0) target = $region45
  $region44: #{barlinedp_forward.1} parent=0 // pred_region
    _
  $region45: #{barlinedp_forward.1} parent=0 // pred_fallthru
    _
  // Predicated region
  $region46: #{barlinedp_forward.1} parent=0 // pred_check
    _
  $region47: #{barlinedp_forward.1} parent=0 // pred_check_branch
    %46 = sbr.rel (0) target = $region49
  $region48: #{barlinedp_forward.1} parent=0 // pred_region
    _
  $region49: #{barlinedp_forward.1} parent=0 // pred_fallthru
    _
  // Predicated region
  $region50: #{barlinedp_forward.1} parent=0 // pred_check
    _
  $region51: #{barlinedp_forward.1} parent=0 // pred_check_branch
    %48 = sbr.rel (0) target = $region53
  $region52: #{barlinedp_forward.1} parent=0 // pred_region
    _
  $region53: #{barlinedp_forward.1} parent=0 // pred_fallthru
    _
  // Predicated region
  $region54: #{barlinedp_forward.1} parent=0 // pred_check
    _
  $region55: #{barlinedp_forward.1} parent=0 // pred_check_branch
    %50 = sbr.rel (0) target = $region57
  $region56: #{barlinedp_forward.1} parent=0 // pred_region
    _
  $region57: #{barlinedp_forward.1} parent=0 // pred_fallthru
    _
  %v52 = vld [vmem:[%s0] sm:$0xf]
  %v53 = vld [vmem:[%s0 + $0x4] sm:$0xf]
  %v54 = vld [vmem:[%s2] sm:$0xf]
  %v55 = vld [vmem:[%s2 + $0x4] sm:$0xf]
  %v56 = vld [vmem:[%s2 + $0x8] sm:$0xf]
  %v57 = vld [vmem:[%s3] sm:$0x1]
  %v59 = vperm.slane %v57, 0
  %v63 = vunpack.c.l.b16 %v52
  %v64 = vunpack.c.l.b16 %v53
  %v65 = vpack.c.b16 %v64, %v63
  %v69 = vunpack.c.l.b16 %v54
  %v70 = vunpack.c.l.b16 %v55
  %v71 = vunpack.c.l.b16 %v56
  %v72 = vpack.c.b16 %v70, %v69
  %v73 = vpack.c.b16 %v71, %v71
  %vm75 = vcmask 195584
  %v77 = vsel %vm75, %v65, 0
  %vm79 = vcmask 1043456
  %v81 = vsel %vm79, %v73, 0
  %83 = vmatpush.bf16.msra.mxu0 0
  %84 = vmatpush.bf16.msra.mxu0 0
  %85 = vmatpush.bf16.msra.mxu0 0
  %86 = vmatpush.bf16.msra.mxu0 0
  %87 = vmatpush.bf16.msra.mxu0 0
  %88 = vmatpush.bf16.msra.mxu0 0
  %89 = vmatpush.bf16.msra.mxu0 %v81
  %90 = vmatpush.bf16.msra.mxu0 %v72
  %91 = vmatmul.bf16.gmra.mxu0 %v77
  %v92 = vpop.f32.mrf.mxu0
  %v93 = vadd.f32 %v59, %v92
  %v94 = vpop.f32.mrf.mxu0
  %v95 = vadd.f32 %v59, %v94
  %96 = vdwg.mxu0
  %v97 = vld [vmem:[%s6] sm:$0xf]
  %v98 = vld [vmem:[%s6 + $0x4] sm:$0xf]
  %v99 = vld [vmem:[%s6 + $0x8] sm:$0xf]
  %v100 = vld [vmem:[%s7] sm:$0x1]
  %v102 = vperm.slane %v100, 0
  %v107 = vunpack.c.l.b16 %v97
  %v108 = vunpack.c.l.b16 %v98
  %v109 = vunpack.c.l.b16 %v99
  %v110 = vpack.c.b16 %v108, %v107
  %v111 = vpack.c.b16 %v109, %v109
  %v114 = vsel %vm79, %v111, 0
  %116 = vmatpush.bf16.msra.mxu0 0
  %117 = vmatpush.bf16.msra.mxu0 0
  %118 = vmatpush.bf16.msra.mxu0 0
  %119 = vmatpush.bf16.msra.mxu0 0
  %120 = vmatpush.bf16.msra.mxu0 0
  %121 = vmatpush.bf16.msra.mxu0 0
  %122 = vmatpush.bf16.msra.mxu0 %v114
  %123 = vmatpush.bf16.msra.mxu0 %v110
  %124 = vmatmul.bf16.gmra.mxu0 %v77
  %v125 = vpop.f32.mrf.mxu0
  %v126 = vadd.f32 %v102, %v125
  %v127 = vpop.f32.mrf.mxu0
  %v128 = vadd.f32 %v102, %v127
  %129 = vdwg.mxu0
  %v130 = vmax.f32 %v126, 0.0
  %v131 = vmax.f32 %v128, 0.0
  %v132 = vlaneseq
  %v133 = vand.u32 %v132, 127
  %vm134 = vcmp.lt.s32.totalorder %v133, 16
  %vm135 = vcmp.ge.s32.totalorder %v133, 32
  %vm136 = vcmp.lt.s32.totalorder %v133, 48
  %vm137 = vmand %vm135, %vm136
  %vm138 = vmor %vm134, %vm137
  %vm139 = vcmp.ge.s32.totalorder %v133, 64
  %vm140 = vcmp.lt.s32.totalorder %v133, 80
  %vm141 = vmand %vm139, %vm140
  %vm142 = vmor %vm138, %vm141
  %v143 = vsel %vm142, 1, 0
  %vm144 = vcmp.eq.s32.totalorder %v143, 1
  %v146 = vrot.slane %v95, 6
  %v148 = vsel %vm144, %v93, %v146
  %vm149 = vcmask 779264
  %150 = vst.msk [vmem:[#allocation2] sm:$0x3] %vm149, %v148
  %v152 = vrot.slane %v130, 1
  %vm154 = vcmask 778240
  %155 = vst.msk [vmem:[#allocation4] sm:$0x1] %vm154, %v130
  %156 = vst.msk [vmem:[#allocation4 + $0x8] sm:$0x1] %vm154, %v152
  %v157 = vrot.slane %v95, 2
  %v159 = vsel %vm144, %v93, %v157
  %s160 = scalar_lea.vmem [#allocation2], 2
  %vm161 = vcmask 781314
  %162 = vst.msk [vmem:[%s160 - $0x2] sm:$0xc] %vm161, %v159
  %163 = vst [vmem:[#allocation1] sm:$0xff] %v130
  %s164 = scalar_lea.vmem [#allocation1], 2
  %v165 = vld [vmem:[%s164] ss:$9 sm:$0xff]
  %s166 = scalar_lea.vmem [#allocation1], 3
  %v167 = vld [vmem:[%s166] ss:$9 sm:$0xff]
  %170 = vst.msk [vmem:[#allocation4 + $0x1] sm:$0x1] %vm154, %v165
  %171 = vst.msk [vmem:[#allocation4 + $0x9] sm:$0x1] %vm154, %v167
  %s172 = scalar_lea.vmem [#allocation2], 4
  %vm173 = vcmask 783364
  %174 = vst.msk [vmem:[%s172 - $0x4] sm:$0x30] %vm173, %v148
  %175 = vst [vmem:[#allocation1] sm:$0xff] %v130
  %s176 = scalar_lea.vmem [#allocation1], 4
  %v177 = vld [vmem:[%s176] ss:$9 sm:$0xff]
  %s178 = scalar_lea.vmem [#allocation1], 5
  %v179 = vld [vmem:[%s178] ss:$9 sm:$0xff]
  %182 = vst.msk [vmem:[#allocation4 + $0x2] sm:$0x1] %vm154, %v177
  %183 = vst.msk [vmem:[#allocation4 + $0xa] sm:$0x1] %vm154, %v179
  %s184 = scalar_lea.vmem [#allocation2], 6
  %vm185 = vcmask 785414
  %186 = vst.msk [vmem:[%s184 - $0x6] sm:$0xc0] %vm185, %v159
  %187 = vst [vmem:[#allocation1] sm:$0xff] %v130
  %s188 = scalar_lea.vmem [#allocation1], 6
  %v189 = vld [vmem:[%s188] ss:$9 sm:$0xff]
  %s190 = scalar_lea.vmem [#allocation1], 7
  %v191 = vld [vmem:[%s190] ss:$9 sm:$0xff]
  %194 = vst.msk [vmem:[#allocation4 + $0x3] sm:$0x1] %vm154, %v189
  %195 = vst.msk [vmem:[#allocation4 + $0xb] sm:$0x1] %vm154, %v191
  %v197 = vrot.slane %v93, 6
  %v199 = vsel %vm144, %v95, %v197
  %s200 = scalar_lea.vmem [#allocation2], 8
  %201 = vst.msk [vmem:[%s200] sm:$0x3] %vm149, %v199
  %v203 = vrot.slane %v131, 1
  %205 = vst.msk [vmem:[#allocation4 + $0x4] sm:$0x1] %vm154, %v131
  %206 = vst.msk [vmem:[#allocation4 + $0xc] sm:$0x1] %vm154, %v203
  %v207 = vrot.slane %v93, 2
  %v209 = vsel %vm144, %v95, %v207
  %s210 = scalar_lea.vmem [#allocation2], 10
  %211 = vst.msk [vmem:[%s210 - $0x2] sm:$0xc] %vm161, %v209
  %212 = vst [vmem:[#allocation1] sm:$0xff] %v131
  %s213 = scalar_lea.vmem [#allocation1], 2
  %v214 = vld [vmem:[%s213] ss:$9 sm:$0xff]
  %s215 = scalar_lea.vmem [#allocation1], 3
  %v216 = vld [vmem:[%s215] ss:$9 sm:$0xff]
  %219 = vst.msk [vmem:[#allocation4 + $0x5] sm:$0x1] %vm154, %v214
  %220 = vst.msk [vmem:[#allocation4 + $0xd] sm:$0x1] %vm154, %v216
  %s221 = scalar_lea.vmem [#allocation2], 12
  %222 = vst.msk [vmem:[%s221 - $0x4] sm:$0x30] %vm173, %v199
  %223 = vst [vmem:[#allocation1] sm:$0xff] %v131
  %s224 = scalar_lea.vmem [#allocation1], 4
  %v225 = vld [vmem:[%s224] ss:$9 sm:$0xff]
  %s226 = scalar_lea.vmem [#allocation1], 5
  %v227 = vld [vmem:[%s226] ss:$9 sm:$0xff]
  %230 = vst.msk [vmem:[#allocation4 + $0x6] sm:$0x1] %vm154, %v225
  %231 = vst.msk [vmem:[#allocation4 + $0xe] sm:$0x1] %vm154, %v227
  %s232 = scalar_lea.vmem [#allocation2], 14
  %233 = vst.msk [vmem:[%s232 - $0x6] sm:$0xc0] %vm185, %v209
  %234 = vst [vmem:[#allocation1] sm:$0xff] %v131
  %s235 = scalar_lea.vmem [#allocation1], 6
  %v236 = vld [vmem:[%s235] ss:$9 sm:$0xff]
  %s237 = scalar_lea.vmem [#allocation1], 7
  %v238 = vld [vmem:[%s237] ss:$9 sm:$0xff]
  %241 = vst.msk [vmem:[#allocation4 + $0x7] sm:$0x1] %vm154, %v236
  %242 = vst.msk [vmem:[#allocation4 + $0xf] sm:$0x1] %vm154, %v238
  %v243 = vld [vmem:[%s4] sm:$0xf]
  %v244 = vld [vmem:[%s4 + $0x4] sm:$0xf]
  %v245 = vld [vmem:[%s4 + $0x8] sm:$0xf]
  %v246 = vld [vmem:[%s4 + $0xc] sm:$0xf]
  %v247 = vld [vmem:[%s5] sm:$0x1]
  %v249 = vperm.slane %v247, 0
  %v251 = vld [vmem:[#allocation2] sm:$0x3]
  %v256 = vunpack.c.l.b16 %v243
  %v257 = vunpack.c.l.b16 %v244
  %v258 = vunpack.c.l.b16 %v245
  %v259 = vunpack.c.l.b16 %v246
  %v260 = vpack.c.b16 %v257, %v256
  %v261 = vpack.c.b16 %v259, %v258
  %vm264 = vcmask 261120
  %v266 = vsel %vm264, 0, 0
  %268 = vmatpush.bf16.msra.mxu0 0
  %269 = vmatpush.bf16.msra.mxu0 0
  %270 = vmatpush.bf16.msra.mxu0 0
  %271 = vmatpush.bf16.msra.mxu0 0
  %272 = vmatpush.bf16.msra.mxu0 0
  %273 = vmatpush.bf16.msra.mxu0 0
  %274 = vmatpush.bf16.msra.mxu0 %v261
  %275 = vmatpush.bf16.msra.mxu0 %v260
  %276 = vmatmul.bf16.gmra.mxu0 %v266
  %v277 = vpop.f32.mrf.mxu0
  %v278 = vadd.f32 %v249, %v277
  %v279 = vpop.f32.mrf.mxu0
  %280 = vdwg.mxu0
  %v281 = vadd.f32 %v251, %v278
  %v282 = vxor.u32 %v281, 2147483648
  %v283 = vmul.f32 %v282, 1.442695
  %v284 = vpow.pop %v283
  %v285 = vadd.f32 %v284, 1.0
  %v286 = vrcp.pop %v285
  %v287 = vmul.f32 %v285, %v286
  %v288 = vsub.f32 1.0, %v287
  %v289 = vmul.f32 %v286, %v288
  %v290 = vadd.f32 %v286, %v289
  %vm291 = vweird.f32 %v285
  %vm292 = vweird.f32 %v286
  %vm293 = vmor %vm291, %vm292
  %v294 = vsel %vm293, %v286, %v290
  %v295 = vand.u32 2147483647, %v285
  %vm296 = vcmp.eq.f32.partialorder %v295, 8.507059e+37
  %v297 = vand.u32 %v285, 2147483648
  %v298 = vor.u32 1.1754944e-38, %v297
  %v299 = vsel %vm296, %v298, %v294
  %v300 = vmul.f32 1.0, %v299
  %302 = vrot.lane.b32.xlu0 %v278, 64
  %v303 = vpop.permute.xlu0 %302
  %v305 = vmul.f32 %v300, %v303
  %307 = vrot.lane.b32.xlu0 %v305, 64
  %v308 = vpop.permute.xlu0 %307
  %v310 = vadd.f32 %v251, %v308
  %v311 = vtanh.pop %v310
  %v312 = vsub.f32 1.0, %v300
  %314 = vrot.lane.b32.xlu0 %v311, 96
  %v315 = vpop.permute.xlu0 %314
  %v317 = vmul.f32 %v312, %v315
  %v318 = vmul.f32 %v300, 0.0
  %v319 = vadd.f32 %v317, %v318
  %321 = vrot.lane.b32.xlu0 %v319, 96
  %v322 = vpop.permute.xlu0 %321
  %vm324 = vcmask 123904
  %325 = vst.msk [vmem:[#allocation3] sm:$0x3] %vm324, %v322
  %s326 = scalar_lea.vmem [#allocation3], 14
  %vm327 = vcmask 255104
  %328 = vst.msk [vmem:[%s326] sm:$0x3] %vm327, %v322
  %v329 = vld [vmem:[%s160] sm:$0x3]
  %v330 = vpack.c.bf16 %v319, %v319
  %332 = vrot.lane.b32.xlu0 %v330, 96
  %v333 = vpop.permute.xlu0 %332
  %v335 = vsel %vm264, %v333, 0
  %337 = vmatpush.bf16.msra.mxu0 0
  %338 = vmatpush.bf16.msra.mxu0 0
  %339 = vmatpush.bf16.msra.mxu0 0
  %340 = vmatpush.bf16.msra.mxu0 0
  %341 = vmatpush.bf16.msra.mxu0 0
  %342 = vmatpush.bf16.msra.mxu0 0
  %343 = vmatpush.bf16.msra.mxu0 %v261
  %344 = vmatpush.bf16.msra.mxu0 %v260
  %345 = vmatmul.bf16.gmra.mxu0 %v335
  %v346 = vpop.f32.mrf.mxu0
  %v347 = vadd.f32 %v249, %v346
  %v348 = vpop.f32.mrf.mxu0
  %349 = vdwg.mxu0
  %v350 = vadd.f32 %v329, %v347
  %v351 = vxor.u32 %v350, 2147483648
  %v352 = vmul.f32 %v351, 1.442695
  %v353 = vpow.pop %v352
  %v354 = vadd.f32 %v353, 1.0
  %v355 = vrcp.pop %v354
  %v356 = vmul.f32 %v354, %v355
  %v357 = vsub.f32 1.0, %v356
  %v358 = vmul.f32 %v355, %v357
  %v359 = vadd.f32 %v355, %v358
  %vm360 = vweird.f32 %v354
  %vm361 = vweird.f32 %v355
  %vm362 = vmor %vm360, %vm361
  %v363 = vsel %vm362, %v355, %v359
  %v364 = vand.u32 2147483647, %v354
  %vm365 = vcmp.eq.f32.partialorder %v364, 8.507059e+37
  %v366 = vand.u32 %v354, 2147483648
  %v367 = vor.u32 1.1754944e-38, %v366
  %v368 = vsel %vm365, %v367, %v363
  %v369 = vmul.f32 1.0, %v368
  %371 = vrot.lane.b32.xlu0 %v347, 64
  %v372 = vpop.permute.xlu0 %371
  %v374 = vmul.f32 %v369, %v372
  %376 = vrot.lane.b32.xlu0 %v374, 64
  %v377 = vpop.permute.xlu0 %376
  %v379 = vadd.f32 %v329, %v377
  %v380 = vtanh.pop %v379
  %v381 = vsub.f32 1.0, %v369
  %383 = vrot.lane.b32.xlu0 %v380, 96
  %v384 = vpop.permute.xlu0 %383
  %v386 = vmul.f32 %v381, %v384
  %v387 = vmul.f32 %v369, %v319
  %v388 = vadd.f32 %v386, %v387
  %390 = vrot.lane.b32.xlu0 %v388, 96
  %v391 = vpop.permute.xlu0 %390
  %s393 = scalar_lea.vmem [#allocation3], 2
  %394 = vst.msk [vmem:[%s393] sm:$0x3] %vm324, %v391
  %s395 = scalar_lea.vmem [#allocation3], 12
  %396 = vst.msk [vmem:[%s395] sm:$0x3] %vm327, %v391
  %v397 = vld [vmem:[%s172] sm:$0x3]
  %v398 = vpack.c.bf16 %v388, %v388
  %400 = vrot.lane.b32.xlu0 %v398, 96
  %v401 = vpop.permute.xlu0 %400
  %v403 = vsel %vm264, %v401, 0
  %405 = vmatpush.bf16.msra.mxu0 0
  %406 = vmatpush.bf16.msra.mxu0 0
  %407 = vmatpush.bf16.msra.mxu0 0
  %408 = vmatpush.bf16.msra.mxu0 0
  %409 = vmatpush.bf16.msra.mxu0 0
  %410 = vmatpush.bf16.msra.mxu0 0
  %411 = vmatpush.bf16.msra.mxu0 %v261
  %412 = vmatpush.bf16.msra.mxu0 %v260
  %413 = vmatmul.bf16.gmra.mxu0 %v403
  %v414 = vpop.f32.mrf.mxu0
  %v415 = vadd.f32 %v249, %v414
  %v416 = vpop.f32.mrf.mxu0
  %417 = vdwg.mxu0
  %v418 = vadd.f32 %v397, %v415
  %v419 = vxor.u32 %v418, 2147483648
  %v420 = vmul.f32 %v419, 1.442695
  %v421 = vpow.pop %v420
  %v422 = vadd.f32 %v421, 1.0
  %v423 = vrcp.pop %v422
  %v424 = vmul.f32 %v422, %v423
  %v425 = vsub.f32 1.0, %v424
  %v426 = vmul.f32 %v423, %v425
  %v427 = vadd.f32 %v423, %v426
  %vm428 = vweird.f32 %v422
  %vm429 = vweird.f32 %v423
  %vm430 = vmor %vm428, %vm429
  %v431 = vsel %vm430, %v423, %v427
  %v432 = vand.u32 2147483647, %v422
  %vm433 = vcmp.eq.f32.partialorder %v432, 8.507059e+37
  %v434 = vand.u32 %v422, 2147483648
  %v435 = vor.u32 1.1754944e-38, %v434
  %v436 = vsel %vm433, %v435, %v431
  %v437 = vmul.f32 1.0, %v436
  %439 = vrot.lane.b32.xlu0 %v415, 64
  %v440 = vpop.permute.xlu0 %439
  %v442 = vmul.f32 %v437, %v440
  %444 = vrot.lane.b32.xlu0 %v442, 64
  %v445 = vpop.permute.xlu0 %444
  %v447 = vadd.f32 %v397, %v445
  %v448 = vtanh.pop %v447
  %v449 = vsub.f32 1.0, %v437
  %451 = vrot.lane.b32.xlu0 %v448, 96
  %v452 = vpop.permute.xlu0 %451
  %v454 = vmul.f32 %v449, %v452
  %v455 = vmul.f32 %v437, %v388
  %v456 = vadd.f32 %v454, %v455
  %458 = vrot.lane.b32.xlu0 %v456, 96
  %v459 = vpop.permute.xlu0 %458
  %s461 = scalar_lea.vmem [#allocation3], 4
  %462 = vst.msk [vmem:[%s461] sm:$0x3] %vm324, %v459
  %s463 = scalar_lea.vmem [#allocation3], 10
  %464 = vst.msk [vmem:[%s463] sm:$0x3] %vm327, %v459
  %v465 = vld [vmem:[%s184] sm:$0x3]
  %v466 = vpack.c.bf16 %v456, %v456
  %468 = vrot.lane.b32.xlu0 %v466, 96
  %v469 = vpop.permute.xlu0 %468
  %v471 = vsel %vm264, %v469, 0
  %473 = vmatpush.bf16.msra.mxu0 0
  %474 = vmatpush.bf16.msra.mxu0 0
  %475 = vmatpush.bf16.msra.mxu0 0
  %476 = vmatpush.bf16.msra.mxu0 0
  %477 = vmatpush.bf16.msra.mxu0 0
  %478 = vmatpush.bf16.msra.mxu0 0
  %479 = vmatpush.bf16.msra.mxu0 %v261
  %480 = vmatpush.bf16.msra.mxu0 %v260
  %481 = vmatmul.bf16.gmra.mxu0 %v471
  %v482 = vpop.f32.mrf.mxu0
  %v483 = vadd.f32 %v249, %v482
  %v484 = vpop.f32.mrf.mxu0
  %485 = vdwg.mxu0
  %v486 = vadd.f32 %v465, %v483
  %v487 = vxor.u32 %v486, 2147483648
  %v488 = vmul.f32 %v487, 1.442695
  %v489 = vpow.pop %v488
  %v490 = vadd.f32 %v489, 1.0
  %v491 = vrcp.pop %v490
  %v492 = vmul.f32 %v490, %v491
  %v493 = vsub.f32 1.0, %v492
  %v494 = vmul.f32 %v491, %v493
  %v495 = vadd.f32 %v491, %v494
  %vm496 = vweird.f32 %v490
  %vm497 = vweird.f32 %v491
  %vm498 = vmor %vm496, %vm497
  %v499 = vsel %vm498, %v491, %v495
  %v500 = vand.u32 2147483647, %v490
  %vm501 = vcmp.eq.f32.partialorder %v500, 8.507059e+37
  %v502 = vand.u32 %v490, 2147483648
  %v503 = vor.u32 1.1754944e-38, %v502
  %v504 = vsel %vm501, %v503, %v499
  %v505 = vmul.f32 1.0, %v504
  %507 = vrot.lane.b32.xlu0 %v483, 64
  %v508 = vpop.permute.xlu0 %507
  %v510 = vmul.f32 %v505, %v508
  %512 = vrot.lane.b32.xlu0 %v510, 64
  %v513 = vpop.permute.xlu0 %512
  %v515 = vadd.f32 %v465, %v513
  %v516 = vtanh.pop %v515
  %v517 = vsub.f32 1.0, %v505
  %519 = vrot.lane.b32.xlu0 %v516, 96
  %v520 = vpop.permute.xlu0 %519
  %v522 = vmul.f32 %v517, %v520
  %v523 = vmul.f32 %v505, %v456
  %v524 = vadd.f32 %v522, %v523
  %526 = vrot.lane.b32.xlu0 %v524, 96
  %v527 = vpop.permute.xlu0 %526
  %s529 = scalar_lea.vmem [#allocation3], 6
  %530 = vst.msk [vmem:[%s529] sm:$0x3] %vm324, %v527
  %s531 = scalar_lea.vmem [#allocation3], 8
  %532 = vst.msk [vmem:[%s531] sm:$0x3] %vm327, %v527
  %v533 = vld [vmem:[%s200] sm:$0x3]
  %v534 = vpack.c.bf16 %v524, %v524
  %536 = vrot.lane.b32.xlu0 %v534, 96
  %v537 = vpop.permute.xlu0 %536
  %v539 = vsel %vm264, %v537, 0
  %541 = vmatpush.bf16.msra.mxu0 0
  %542 = vmatpush.bf16.msra.mxu0 0
  %543 = vmatpush.bf16.msra.mxu0 0
  %544 = vmatpush.bf16.msra.mxu0 0
  %545 = vmatpush.bf16.msra.mxu0 0
  %546 = vmatpush.bf16.msra.mxu0 0
  %547 = vmatpush.bf16.msra.mxu0 %v261
  %548 = vmatpush.bf16.msra.mxu0 %v260
  %549 = vmatmul.bf16.gmra.mxu0 %v539
  %v550 = vpop.f32.mrf.mxu0
  %v551 = vadd.f32 %v249, %v550
  %v552 = vpop.f32.mrf.mxu0
  %553 = vdwg.mxu0
  %v554 = vadd.f32 %v533, %v551
  %v555 = vxor.u32 %v554, 2147483648
  %v556 = vmul.f32 %v555, 1.442695
  %v557 = vpow.pop %v556
  %v558 = vadd.f32 %v557, 1.0
  %v559 = vrcp.pop %v558
  %v560 = vmul.f32 %v558, %v559
  %v561 = vsub.f32 1.0, %v560
  %v562 = vmul.f32 %v559, %v561
  %v563 = vadd.f32 %v559, %v562
  %vm564 = vweird.f32 %v558
  %vm565 = vweird.f32 %v559
  %vm566 = vmor %vm564, %vm565
  %v567 = vsel %vm566, %v559, %v563
  %v568 = vand.u32 2147483647, %v558
  %vm569 = vcmp.eq.f32.partialorder %v568, 8.507059e+37
  %v570 = vand.u32 %v558, 2147483648
  %v571 = vor.u32 1.1754944e-38, %v570
  %v572 = vsel %vm569, %v571, %v567
  %v573 = vmul.f32 1.0, %v572
  %575 = vrot.lane.b32.xlu0 %v551, 64
  %v576 = vpop.permute.xlu0 %575
  %v578 = vmul.f32 %v573, %v576
  %580 = vrot.lane.b32.xlu0 %v578, 64
  %v581 = vpop.permute.xlu0 %580
  %v583 = vadd.f32 %v533, %v581
  %v584 = vtanh.pop %v583
  %v585 = vsub.f32 1.0, %v573
  %587 = vrot.lane.b32.xlu0 %v584, 96
  %v588 = vpop.permute.xlu0 %587
  %v590 = vmul.f32 %v585, %v588
  %v591 = vmul.f32 %v573, %v524
  %v592 = vadd.f32 %v590, %v591
  %594 = vrot.lane.b32.xlu0 %v592, 96
  %v595 = vpop.permute.xlu0 %594
  %597 = vst.msk [vmem:[%s531] sm:$0x3] %vm324, %v595
  %598 = vst.msk [vmem:[%s529] sm:$0x3] %vm327, %v595
  %v599 = vld [vmem:[%s210] sm:$0x3]
  %v600 = vpack.c.bf16 %v592, %v592
  %602 = vrot.lane.b32.xlu0 %v600, 96
  %v603 = vpop.permute.xlu0 %602
  %v605 = vsel %vm264, %v603, 0
  %607 = vmatpush.bf16.msra.mxu0 0
  %608 = vmatpush.bf16.msra.mxu0 0
  %609 = vmatpush.bf16.msra.mxu0 0
  %610 = vmatpush.bf16.msra.mxu0 0
  %611 = vmatpush.bf16.msra.mxu0 0
  %612 = vmatpush.bf16.msra.mxu0 0
  %613 = vmatpush.bf16.msra.mxu0 %v261
  %614 = vmatpush.bf16.msra.mxu0 %v260
  %615 = vmatmul.bf16.gmra.mxu0 %v605
  %v616 = vpop.f32.mrf.mxu0
  %v617 = vadd.f32 %v249, %v616
  %v618 = vpop.f32.mrf.mxu0
  %619 = vdwg.mxu0
  %v620 = vadd.f32 %v599, %v617
  %v621 = vxor.u32 %v620, 2147483648
  %v622 = vmul.f32 %v621, 1.442695
  %v623 = vpow.pop %v622
  %v624 = vadd.f32 %v623, 1.0
  %v625 = vrcp.pop %v624
  %v626 = vmul.f32 %v624, %v625
  %v627 = vsub.f32 1.0, %v626
  %v628 = vmul.f32 %v625, %v627
  %v629 = vadd.f32 %v625, %v628
  %vm630 = vweird.f32 %v624
  %vm631 = vweird.f32 %v625
  %vm632 = vmor %vm630, %vm631
  %v633 = vsel %vm632, %v625, %v629
  %v634 = vand.u32 2147483647, %v624
  %vm635 = vcmp.eq.f32.partialorder %v634, 8.507059e+37
  %v636 = vand.u32 %v624, 2147483648
  %v637 = vor.u32 1.1754944e-38, %v636
  %v638 = vsel %vm635, %v637, %v633
  %v639 = vmul.f32 1.0, %v638
  %641 = vrot.lane.b32.xlu0 %v617, 64
  %v642 = vpop.permute.xlu0 %641
  %v644 = vmul.f32 %v639, %v642
  %646 = vrot.lane.b32.xlu0 %v644, 64
  %v647 = vpop.permute.xlu0 %646
  %v649 = vadd.f32 %v599, %v647
  %v650 = vtanh.pop %v649
  %v651 = vsub.f32 1.0, %v639
  %653 = vrot.lane.b32.xlu0 %v650, 96
  %v654 = vpop.permute.xlu0 %653
  %v656 = vmul.f32 %v651, %v654
  %v657 = vmul.f32 %v639, %v592
  %v658 = vadd.f32 %v656, %v657
  %660 = vrot.lane.b32.xlu0 %v658, 96
  %v661 = vpop.permute.xlu0 %660
  %663 = vst.msk [vmem:[%s463] sm:$0x3] %vm324, %v661
  %664 = vst.msk [vmem:[%s461] sm:$0x3] %vm327, %v661
  %v665 = vld [vmem:[%s221] sm:$0x3]
  %v666 = vpack.c.bf16 %v658, %v658
  %668 = vrot.lane.b32.xlu0 %v666, 96
  %v669 = vpop.permute.xlu0 %668
  %v671 = vsel %vm264, %v669, 0
  %673 = vmatpush.bf16.msra.mxu0 0
  %674 = vmatpush.bf16.msra.mxu0 0
  %675 = vmatpush.bf16.msra.mxu0 0
  %676 = vmatpush.bf16.msra.mxu0 0
  %677 = vmatpush.bf16.msra.mxu0 0
  %678 = vmatpush.bf16.msra.mxu0 0
  %679 = vmatpush.bf16.msra.mxu0 %v261
  %680 = vmatpush.bf16.msra.mxu0 %v260
  %681 = vmatmul.bf16.gmra.mxu0 %v671
  %v682 = vpop.f32.mrf.mxu0
  %v683 = vadd.f32 %v249, %v682
  %v684 = vpop.f32.mrf.mxu0
  %685 = vdwg.mxu0
  %v686 = vadd.f32 %v665, %v683
  %v687 = vxor.u32 %v686, 2147483648
  %v688 = vmul.f32 %v687, 1.442695
  %v689 = vpow.pop %v688
  %v690 = vadd.f32 %v689, 1.0
  %v691 = vrcp.pop %v690
  %v692 = vmul.f32 %v690, %v691
  %v693 = vsub.f32 1.0, %v692
  %v694 = vmul.f32 %v691, %v693
  %v695 = vadd.f32 %v691, %v694
  %vm696 = vweird.f32 %v690
  %vm697 = vweird.f32 %v691
  %vm698 = vmor %vm696, %vm697
  %v699 = vsel %vm698, %v691, %v695
  %v700 = vand.u32 2147483647, %v690
  %vm701 = vcmp.eq.f32.partialorder %v700, 8.507059e+37
  %v702 = vand.u32 %v690, 2147483648
  %v703 = vor.u32 1.1754944e-38, %v702
  %v704 = vsel %vm701, %v703, %v699
  %v705 = vmul.f32 1.0, %v704
  %707 = vrot.lane.b32.xlu0 %v683, 64
  %v708 = vpop.permute.xlu0 %707
  %v710 = vmul.f32 %v705, %v708
  %712 = vrot.lane.b32.xlu0 %v710, 64
  %v713 = vpop.permute.xlu0 %712
  %v715 = vadd.f32 %v665, %v713
  %v716 = vtanh.pop %v715
  %v717 = vsub.f32 1.0, %v705
  %719 = vrot.lane.b32.xlu0 %v716, 96
  %v720 = vpop.permute.xlu0 %719
  %v722 = vmul.f32 %v717, %v720
  %v723 = vmul.f32 %v705, %v658
  %v724 = vadd.f32 %v722, %v723
  %726 = vrot.lane.b32.xlu0 %v724, 96
  %v727 = vpop.permute.xlu0 %726
  %729 = vst.msk [vmem:[%s395] sm:$0x3] %vm324, %v727
  %730 = vst.msk [vmem:[%s393] sm:$0x3] %vm327, %v727
  %v731 = vld [vmem:[%s232] sm:$0x3]
  %v732 = vpack.c.bf16 %v724, %v724
  %734 = vrot.lane.b32.xlu0 %v732, 96
  %v735 = vpop.permute.xlu0 %734
  %v737 = vsel %vm264, %v735, 0
  %739 = vmatpush.bf16.msra.mxu0 0
  %740 = vmatpush.bf16.msra.mxu0 0
  %741 = vmatpush.bf16.msra.mxu0 0
  %742 = vmatpush.bf16.msra.mxu0 0
  %743 = vmatpush.bf16.msra.mxu0 0
  %744 = vmatpush.bf16.msra.mxu0 0
  %745 = vmatpush.bf16.msra.mxu0 %v261
  %746 = vmatpush.bf16.msra.mxu0 %v260
  %747 = vmatmul.bf16.gmra.mxu0 %v737
  %v748 = vpop.f32.mrf.mxu0
  %v749 = vadd.f32 %v249, %v748
  %v750 = vpop.f32.mrf.mxu0
  %751 = vdwg.mxu0
  %v752 = vadd.f32 %v731, %v749
  %v753 = vxor.u32 %v752, 2147483648
  %v754 = vmul.f32 %v753, 1.442695
  %v755 = vpow.pop %v754
  %v756 = vadd.f32 %v755, 1.0
  %v757 = vrcp.pop %v756
  %v758 = vmul.f32 %v756, %v757
  %v759 = vsub.f32 1.0, %v758
  %v760 = vmul.f32 %v757, %v759
  %v761 = vadd.f32 %v757, %v760
  %vm762 = vweird.f32 %v756
  %vm763 = vweird.f32 %v757
  %vm764 = vmor %vm762, %vm763
  %v765 = vsel %vm764, %v757, %v761
  %v766 = vand.u32 2147483647, %v756
  %vm767 = vcmp.eq.f32.partialorder %v766, 8.507059e+37
  %v768 = vand.u32 %v756, 2147483648
  %v769 = vor.u32 1.1754944e-38, %v768
  %v770 = vsel %vm767, %v769, %v765
  %v771 = vmul.f32 1.0, %v770
  %773 = vrot.lane.b32.xlu0 %v749, 64
  %v774 = vpop.permute.xlu0 %773
  %v776 = vmul.f32 %v771, %v774
  %778 = vrot.lane.b32.xlu0 %v776, 64
  %v779 = vpop.permute.xlu0 %778
  %v781 = vadd.f32 %v731, %v779
  %v782 = vtanh.pop %v781
  %v783 = vsub.f32 1.0, %v771
  %785 = vrot.lane.b32.xlu0 %v782, 96
  %v786 = vpop.permute.xlu0 %785
  %v788 = vmul.f32 %v783, %v786
  %v789 = vmul.f32 %v771, %v724
  %v790 = vadd.f32 %v788, %v789
  %792 = vrot.lane.b32.xlu0 %v790, 96
  %v793 = vpop.permute.xlu0 %792
  %795 = vst.msk [vmem:[%s326] sm:$0x3] %vm324, %v793
  %796 = vst.msk [vmem:[#allocation3] sm:$0x3] %vm327, %v793
  %v797 = vld [vmem:[#allocation3] sm:$0x1]
  %v798 = vld [vmem:[#allocation3 + $0x2] sm:$0x1]
  %v799 = vld [vmem:[#allocation3 + $0x4] sm:$0x1]
  %v800 = vld [vmem:[#allocation3 + $0x6] sm:$0x1]
  %v801 = vld [vmem:[#allocation3 + $0x8] sm:$0x1]
  %v802 = vld [vmem:[#allocation3 + $0xa] sm:$0x1]
  %v803 = vld [vmem:[#allocation3 + $0xc] sm:$0x1]
  %v804 = vld [vmem:[#allocation3 + $0xe] sm:$0x1]
  %v813 = vrot.slane %v798, 7
  %vm814 = vcmask 1041409
  %v815 = vsel %vm814, %v813, %v797
  %v816 = vrot.slane %v799, 6
  %vm817 = vcmask 1042434
  %v818 = vsel %vm817, %v816, %v815
  %v819 = vrot.slane %v800, 5
  %vm820 = vcmask 1043459
  %v821 = vsel %vm820, %v819, %v818
  %v822 = vrot.slane %v801, 4
  %vm823 = vcmask 1044484
  %v824 = vsel %vm823, %v822, %v821
  %v825 = vrot.slane %v802, 3
  %vm826 = vcmask 1045509
  %v827 = vsel %vm826, %v825, %v824
  %v828 = vrot.slane %v803, 2
  %vm829 = vcmask 1046534
  %v830 = vsel %vm829, %v828, %v827
  %v831 = vrot.slane %v804, 1
  %vm832 = vcmask 1047559
  %v833 = vsel %vm832, %v831, %v830
  %835 = vst.msk [vmem:[#allocation5] sm:$0xff] %vm264, %v833
  %v836 = vld [vmem:[#allocation3 + $0x1] sm:$0x1]
  %v837 = vld [vmem:[#allocation3 + $0x3] sm:$0x1]
  %v838 = vld [vmem:[#allocation3 + $0x5] sm:$0x1]
  %v839 = vld [vmem:[#allocation3 + $0x7] sm:$0x1]
  %v840 = vld [vmem:[#allocation3 + $0x9] sm:$0x1]
  %v841 = vld [vmem:[#allocation3 + $0xb] sm:$0x1]
  %v842 = vld [vmem:[#allocation3 + $0xd] sm:$0x1]
  %v843 = vld [vmem:[#allocation3 + $0xf] sm:$0x1]
  %v852 = vrot.slane %v837, 7
  %v853 = vsel %vm814, %v852, %v836
  %v854 = vrot.slane %v838, 6
  %v855 = vsel %vm817, %v854, %v853
  %v856 = vrot.slane %v839, 5
  %v857 = vsel %vm820, %v856, %v855
  %v858 = vrot.slane %v840, 4
  %v859 = vsel %vm823, %v858, %v857
  %v860 = vrot.slane %v841, 3
  %v861 = vsel %vm826, %v860, %v859
  %v862 = vrot.slane %v842, 2
  %v863 = vsel %vm829, %v862, %v861
  %v864 = vrot.slane %v843, 1
  %v865 = vsel %vm832, %v864, %v863
  %867 = vst.msk [vmem:[#allocation5 + $0x8] sm:$0xff] %vm264, %v865
  %v868 = vld [vmem:[#allocation5] sm:$0xff]
  %v869 = vld [vmem:[#allocation5 + $0x8] sm:$0xff]
  %v870 = vpack.c.bf16 %v869, %v868
  %v871 = vld [vmem:[%s8] sm:$0xf]
  %v872 = vld [vmem:[%s8 + $0x4] sm:$0xf]
  %v873 = vld [vmem:[%s8 + $0x8] sm:$0xf]
  %v874 = vld [vmem:[%s8 + $0xc] sm:$0xf]
  %v875 = vld [vmem:[%s9] sm:$0x1]
  %v877 = vperm.slane %v875, 0
  %v883 = vunpack.c.l.b16 %v871
  %v884 = vunpack.c.l.b16 %v872
  %v885 = vunpack.c.l.b16 %v873
  %v886 = vunpack.c.l.b16 %v874
  %v887 = vpack.c.b16 %v884, %v883
  %v888 = vpack.c.b16 %v886, %v885
  %v892 = vsel %vm264, %v870, 0
  %894 = vmatpush.bf16.msra.mxu0 0
  %895 = vmatpush.bf16.msra.mxu0 0
  %896 = vmatpush.bf16.msra.mxu0 0
  %897 = vmatpush.bf16.msra.mxu0 0
  %898 = vmatpush.bf16.msra.mxu0 0
  %899 = vmatpush.bf16.msra.mxu0 0
  %900 = vmatpush.bf16.msra.mxu0 %v888
  %901 = vmatpush.bf16.msra.mxu0 %v887
  %902 = vmatmul.bf16.gmra.mxu0 %v892
  %v903 = vpop.f32.mrf.mxu0
  %v904 = vadd.f32 %v877, %v903
  %v905 = vpop.f32.mrf.mxu0
  %v906 = vadd.f32 %v877, %v905
  %907 = vdwg.mxu0
  %v908 = vmax.f32 %v904, 0.0
  %v909 = vmax.f32 %v906, 0.0
  %vm910 = vcmask 785408
  %911 = vst.msk [vmem:[#allocation6] sm:$0xff] %vm910, %v908
  %s912 = scalar_lea.vmem [#allocation6], 8
  %913 = vst.msk [vmem:[%s912] sm:$0xff] %vm910, %v909
  %v914 = vld [vmem:[#allocation4] sm:$0xff]
  %v915 = vld [vmem:[#allocation4 + $0x8] sm:$0xff]
  %v916 = vld [vmem:[#allocation6] sm:$0xff]
  %v917 = vld [vmem:[#allocation6 + $0x8] sm:$0xff]
  %v918 = vpack.c.bf16 %v916, %v916
  %v919 = vpack.c.bf16 %v917, %v917
  %v920 = vld [vmem:[%s1] sm:$0xff]
  %v921 = vld [vmem:[%s1 + $0x8] sm:$0xff]
  %v922 = vld [vmem:[#allocation7] sm:$0x1]
  %v923 = vld [vmem:[%s10] sm:$0x1]
  %v925 = vperm.slane %v923, 0
  %v927 = vmul.f32 %v914, %v925
  %v928 = vmul.f32 %v915, %v925
  %v929 = vpack.c.bf16 %v927, %v927
  %v930 = vpack.c.bf16 %v928, %v928
  %v932 = vperm.slane %v922, 0
  %933 = vset.pattern.permute.xlu0 0
  %934 = vperm.xlu0 %933, %v932
  %v935 = vpop.permute.xlu0 %934
  %v938 = vsel %vm910, %v929, 0
  %v941 = vsel %vm910, %v918, 0
  %943 = vmatpush.bf16.xpose.msra.mxu0 0
  %944 = vmatpush.bf16.xpose.msra.mxu0 0
  %945 = vmatpush.bf16.xpose.msra.mxu0 0
  %946 = vmatpush.bf16.xpose.msra.mxu0 0
  %947 = vmatpush.bf16.xpose.msra.mxu0 0
  %948 = vmatpush.bf16.xpose.msra.mxu0 0
  %949 = vmatpush.bf16.xpose.msra.mxu0 0
  %950 = vmatpush.bf16.xpose.msra.mxu0 %v941
  %951 = vmatmul.bf16.gmra.mxu0 %v938
  %v952 = vpop.f32.mrf.mxu0
  %v953 = vadd.f32 %v935, %v952
  %v954 = vpop.f32.mrf.mxu0
  %955 = vdwg.mxu0
  %v957 = vsel %vm910, %v930, 0
  %v960 = vsel %vm910, %v919, 0
  %962 = vmatpush.bf16.xpose.msra.mxu0 0
  %963 = vmatpush.bf16.xpose.msra.mxu0 0
  %964 = vmatpush.bf16.xpose.msra.mxu0 0
  %965 = vmatpush.bf16.xpose.msra.mxu0 0
  %966 = vmatpush.bf16.xpose.msra.mxu0 0
  %967 = vmatpush.bf16.xpose.msra.mxu0 0
  %968 = vmatpush.bf16.xpose.msra.mxu0 0
  %969 = vmatpush.bf16.xpose.msra.mxu0 %v960
  %970 = vmatmul.bf16.gmra.mxu0 %v957
  %v971 = vpop.f32.mrf.mxu0
  %v972 = vadd.f32 %v935, %v971
  %v973 = vpop.f32.mrf.mxu0
  %974 = vdwg.mxu0
  %976 = vset.pattern.permute.xlu0 0
  %977 = vperm.xlu0 %976, %v920
  %v978 = vpop.permute.xlu0 %977
  %981 = vset.pattern.permute.xlu0 0
  %982 = vperm.xlu0 %981, %v921
  %v983 = vpop.permute.xlu0 %982
  %v985 = vmul.f32 %v953, %v978
  %v986 = vmul.f32 %v972, %v983
  %v987 = vpack.c.bf16 %v985, %v985
  %v988 = vpack.c.bf16 %v986, %v986
  %vm989 = vcmask 64512
  %v991 = vsel %vm989, %v987, 0
  %v993 = vsel %vm79, %v918, 0
  %995 = vmatpush.bf16.msra.mxu0 0
  %996 = vmatpush.bf16.msra.mxu0 0
  %997 = vmatpush.bf16.msra.mxu0 0
  %998 = vmatpush.bf16.msra.mxu0 0
  %999 = vmatpush.bf16.msra.mxu0 0
  %1000 = vmatpush.bf16.msra.mxu0 0
  %1001 = vmatpush.bf16.msra.mxu0 0
  %1002 = vmatpush.bf16.msra.mxu0 %v993
  %1003 = vmatmul.bf16.gmra.mxu0 %v991
  %v1004 = vpop.f32.mrf.mxu0
  %v1005 = vadd.f32 0.0, %v1004
  %v1006 = vpop.f32.mrf.mxu0
  %1007 = vdwg.mxu0
  %v1009 = vsel %vm989, %v988, 0
  %v1011 = vsel %vm79, %v919, 0
  %1013 = vmatpush.bf16.msra.mxu0 0
  %1014 = vmatpush.bf16.msra.mxu0 0
  %1015 = vmatpush.bf16.msra.mxu0 0
  %1016 = vmatpush.bf16.msra.mxu0 0
  %1017 = vmatpush.bf16.msra.mxu0 0
  %1018 = vmatpush.bf16.msra.mxu0 0
  %1019 = vmatpush.bf16.msra.mxu0 0
  %1020 = vmatpush.bf16.msra.mxu0 %v1011
  %1021 = vmatmul.bf16.gmra.mxu0 %v1009
  %v1022 = vpop.f32.mrf.mxu0
  %v1023 = vadd.f32 0.0, %v1022
  %v1024 = vpop.f32.mrf.mxu0
  %1025 = vdwg.mxu0
  %v1026 = vmul.f32 %v914, %v1005
  %v1027 = vmul.f32 %v915, %v1023
  %v1028 = vsel %vm910, %v1026, 0.0
  %v1029 = vrot.slane %v1028, 4
  %v1030 = vadd.f32 %v1028, %v1029
  %v1031 = vrot.slane %v1030, 2
  %v1032 = vadd.f32 %v1030, %v1031
  %v1033 = vrot.slane %v1032, 1
  %v1034 = vadd.f32 %v1032, %v1033
  %v1035 = vsel %vm910, %v1027, 0.0
  %v1036 = vrot.slane %v1035, 4
  %v1037 = vadd.f32 %v1035, %v1036
  %v1038 = vrot.slane %v1037, 2
  %v1039 = vadd.f32 %v1037, %v1038
  %v1040 = vrot.slane %v1039, 1
  %v1041 = vadd.f32 %v1039, %v1040
  %v1042 = vld [vmem:[%s12] sm:$0x1]
  %v1044 = vperm.slane %v1042, 0
  %v1046 = vmul.f32 %v1034, %v1044
  %v1047 = vmul.f32 %v1041, %v1044
  %v1050 = vrot.slane %v1047, 7
  %v1051 = vsel %vm814, %v1050, %v1046
  %v1053 = vsel %vm149, %v1051, 0.0
  %1054 = vadd.xlane.f32.xlu0 %v1053
  %v1055 = vpop.xlane.xlu0 %1054
  %v1056 = vld [vmem:[#allocation8] sm:$0x1]
  %v1058 = vperm.slane %v1056, 0
  %v1060 = vadd.f32 %v1055, %v1058
  %v1061 = vlaneseq
  %v1062 = vshrl.u32 %v1061, 7
  %vm1063 = vcmp.eq.s32.totalorder %v1062, %v133
  %v1064 = vsel %vm1063, 1, 0
  %v1065 = vcvt.s32.f32 %v1064
  %v1066 = vmul.f32 %v985, %v1065
  %v1067 = vmul.f32 %v986, %v1065
  %v1068 = vsel %vm989, %v1066, 0.0
  %v1069 = vrot.slane %v1068, 4
  %v1070 = vadd.f32 %v1068, %v1069
  %v1071 = vrot.slane %v1070, 2
  %v1072 = vadd.f32 %v1070, %v1071
  %v1073 = vrot.slane %v1072, 1
  %v1074 = vadd.f32 %v1072, %v1073
  %v1075 = vsel %vm989, %v1067, 0.0
  %v1076 = vrot.slane %v1075, 4
  %v1077 = vadd.f32 %v1075, %v1076
  %v1078 = vrot.slane %v1077, 2
  %v1079 = vadd.f32 %v1077, %v1078
  %v1080 = vrot.slane %v1079, 1
  %v1081 = vadd.f32 %v1079, %v1080
  %v1084 = vsel %vm814, %v1081, %v1074
  %1085 = vrot.lane.b32.xlu0 %v1084, 1
  %v1086 = vpop.permute.xlu0 %1085
  %vm1088 = vcmask 7168
  %v1089 = vsel %vm1088, %v1060, %v1086
  %vm1090 = vcmask 72704
  %v1091 = vsel %vm1090, %v1089, 0.0
  %1092 = vst [vmem:[%s14] sm:$0x3] %v1091
  // Predicated region
  $region58: #{barlinedp_forward.1} parent=0 // pred_check
    _
  $region59: #{barlinedp_forward.1} parent=0 // pred_check_branch
    %1094 = sbr.rel (0) target = $region61
  $region60: #{barlinedp_forward.1} parent=0 // pred_region
    _
  $region61: #{barlinedp_forward.1} parent=0 // pred_fallthru
    _
  // Predicated region
  $region62: #{barlinedp_forward.1} parent=0 // pred_check
    _
  $region63: #{barlinedp_forward.1} parent=0 // pred_check_branch
    %1096 = sbr.rel (0) target = $region65
  $region64: #{barlinedp_forward.1} parent=0 // pred_region
    _
  $region65: #{barlinedp_forward.1} parent=0 // pred_fallthru
    _

</llo_original>
